<compile_context>
chip_gen: v5e
topology: v5e:2x2
jax: 0.10.0
libtpu: 0.0.40
codegen_flags: <defaults>
</compile_context>

<pallas_src>
import math

import jax
import jax.numpy as jnp
import numpy as np
from jax import lax
from jax.experimental import pallas as pl
from jax.experimental.pallas import tpu as pltpu

# ---------------- small synthetic config ----------------
B, S = 2, 8          # batch, sequence length
D = 32               # n_embd
H = 4                # n_head
DH = D // H          # head / query dimension
M = 16               # num_feats (generalized random features)
L = 2                # n_layer
FF = D               # feed_forward_dimensions = n_embd
VOCAB = 50
LN_EPS = 1e-5
ATTN_EPS = 1e-6

HD = H * DH          # 32  : all heads fused on the lane axis
HM = H * M           # 64  : all heads' random features fused on the lane axis
QKV = 3 * HD         # 96
QKV_PAD = 128        # fused qkv projection padded to one full vreg width;
                     # the 32 pad lanes carry constant 1.0 ("ones" columns)


def _gelu(x):
    # exact (erf) GELU, matching torch.nn.functional.gelu default
    return 0.5 * x * (1.0 + lax.erf(x * (1.0 / math.sqrt(2.0))))


def _layernorm(x, g, b):
    mu = jnp.mean(x, axis=-1, keepdims=True)
    var = jnp.mean((x - mu) ** 2, axis=-1, keepdims=True)
    return (x - mu) * lax.rsqrt(var + LN_EPS) * g + b


# ---------------- host-side constant tables ----------------
def _rotary_tables(seq_len, dim):
    inv_freq = 1.0 / (10000.0 ** (np.arange(0, dim, 2, dtype=np.float32) / dim))
    t = np.arange(seq_len, dtype=np.float32)
    freqs = np.einsum('i,j->ij', t, inv_freq).astype(np.float32)
    emb = np.concatenate([freqs, freqs], axis=-1)
    return np.cos(emb).astype(np.float32), np.sin(emb).astype(np.float32)   # (S, DH)


def _rotate_half_matrix(n_rep):
    # per-head block P with (q @ P) == rotate_half(q) == concat([-x2, x1]),
    # replicated n_rep times on the block diagonal
    half = DH // 2
    blk = np.zeros((DH, DH), np.float32)
    blk[:half, half:] = np.eye(half, dtype=np.float32)
    blk[half:, :half] = -np.eye(half, dtype=np.float32)
    return np.kron(np.eye(n_rep, dtype=np.float32), blk)                    # (n_rep*DH,)*2


def _head_block_mask2():
    # 1 where the (M-feature, DH-value) blocks belong to the same head,
    # duplicated along lanes: left half masks K^T V, right half masks the
    # per-head normalizer columns.  (HM, 2*HD)
    blk = np.kron(np.eye(H, dtype=np.float32), np.ones((M, DH), np.float32))
    return np.concatenate([blk, blk], axis=1)


# ---------------- Pallas kernel: one batch row, all layers ----------------
def molformer_kernel(x_ref, kmask_ref, cos_ref, sin_ref, rot_ref, blk_ref,
                     wqkv_ref, bqkv_ref, omega_ref, wo_ref, w1_ref, w2_ref,
                     vec_ref, gf_ref, bf_ref, out_ref):
    x = x_ref[0]                 # (S, D)   embeddings for this batch row
    kmask = kmask_ref[0]         # (S, 1)   key length mask
    cos2 = cos_ref[...]          # (S, 2*HD) cos tiled across {q,k} x heads
    sin2 = sin_ref[...]          # (S, 2*HD)
    rot2 = rot_ref[...]          # (2*HD, 2*HD) signed rotate_half permutation
    blk2 = blk_ref[...]          # (HM, 2*HD)   same-head block mask, duplicated

    for l in range(L):           # static unroll over layers (weights stay in VMEM)
        # fused Q/K/V projection for all heads, ONE lane-dense matmul.
        # Lanes: [q(0:32) | k(32:64) | v(64:96) | ones(96:128)]  (bias = 1 there)
        qkv = jnp.dot(x, wqkv_ref[l], preferred_element_type=jnp.float32) + bqkv_ref[l]
        qk = qkv[:, :2 * HD]                 # (S, 64)
        v_big = qkv[:, 2 * HD:]              # (S, 64) = [v | 1]

        # rotary position embedding for q AND k in one matmul (rotate_half == @rot2)
        qk = qk * cos2 + jnp.dot(qk, rot2, preferred_element_type=jnp.float32) * sin2

        # GeneralizedRandomFeatures for q AND k in one 128-lane matmul
        feat = jnp.maximum(
            jnp.dot(qk, omega_ref[l], preferred_element_type=jnp.float32), 0.0)  # (S, 128)
        qf = feat[:, :HM]                    # (S, 64)
        kf = feat[:, HM:] * kmask            # (S, 64), padded keys zeroed

        # linear attention: kf^T @ [v | 1] gives K^T V (left) and sum_s K (right,
        # broadcast over DH lanes) in one matmul; mask off-diagonal head blocks.
        kv_big = lax.dot_general(kf, v_big, (((0,), (0,)), ((), ())),
                                 preferred_element_type=jnp.float32) * blk2      # (HM, 64)
        r = jnp.dot(qf, kv_big, preferred_element_type=jnp.float32)              # (S, 64)
        attn = r[:, :HD] * pl.reciprocal(r[:, HD:] + ATTN_EPS, approx=True)      # (S, 32)

        vec = vec_ref[l]                     # (8, D): [bo, g1, be1, b1, b2, g2, be2, 0]
        attn_out = jnp.dot(attn, wo_ref[l], preferred_element_type=jnp.float32) + vec[0:1]

        # residual + post-norm transformer block (fast_transformers layout)
        x = _layernorm(x + attn_out, vec[1:2], vec[2:3])
        y = _gelu(jnp.dot(x, w1_ref[l], preferred_element_type=jnp.float32) + vec[3:4])
        y = jnp.dot(y, w2_ref[l], preferred_element_type=jnp.float32) + vec[4:5]
        x = _layernorm(x + y, vec[5:6], vec[6:7])

    # final encoder LayerNorm.
    # (D=32 < 128 lanes -> masked store; negligible at this toy size. Real-model
    #  D is a multiple of 128 and the store is lane-dense.)
    out_ref[0] = _layernorm(x, gf_ref[...], bf_ref[...])


# ---------------- wrapper ----------------
@jax.jit
def molformer_forward(idx, mask, params):
    # glue: embedding gather + (identity) dropout + length mask construction
    x0 = jnp.take(params["tok_emb"], idx, axis=0).astype(jnp.float32)       # (B,S,D)
    lengths = jnp.sum(mask, axis=-1)
    kmask = (jnp.arange(S)[None, :] < lengths[:, None]).astype(jnp.float32)[..., None]

    # ---- constant tables (trace-time constants) ----
    cos, sin = _rotary_tables(S, DH)
    cos2 = jnp.asarray(np.tile(cos, (1, 2 * H)))                            # (S, 2*HD)
    sin2 = jnp.asarray(np.tile(sin, (1, 2 * H)))
    rot2 = jnp.asarray(_rotate_half_matrix(2 * H))                          # (2*HD, 2*HD)
    blk2 = jnp.asarray(_head_block_mask2())                                 # (HM, 2*HD)

    # ---- fuse per-head weights into lane-dense layouts ----
    def heads_to_lanes(w):          # (L, H, D, DH) -> (L, D, H*DH)
        return jnp.transpose(w, (0, 2, 1, 3)).reshape(L, D, HD)

    wq = heads_to_lanes(params["Wq"])
    wk = heads_to_lanes(params["Wk"])
    wv = heads_to_lanes(params["Wv"])
    wqkv = jnp.concatenate([wq, wk, wv], axis=-1)                           # (L, D, 96)
    wqkv = jnp.pad(wqkv, ((0, 0), (0, 0), (0, QKV_PAD - QKV)))              # pad lanes: W=0

    bq = params["bq"].reshape(L, 1, HD)
    bk = params["bk"].reshape(L, 1, HD)
    bv = params["bv"].reshape(L, 1, HD)
    ones_lanes = jnp.ones((L, 1, QKV_PAD - QKV), jnp.float32)               # pad lanes: b=1
    bqkv = jnp.concatenate([bq, bk, bv, ones_lanes], axis=-1)               # (L, 1, 128)

    # block-diagonal omega over heads (shared omega per layer, as in reference),
    # then block-diagonal over {q, k} -> (L, 2*HD, 2*HM) = (L, 64, 128)
    eye_h = jnp.eye(H, dtype=jnp.float32)
    omega_bd = jnp.einsum('hg,lem->lhegm', eye_h, params["omega"]).reshape(L, HD, HM)
    eye2 = jnp.eye(2, dtype=jnp.float32)
    omega2 = jnp.einsum('ab,lij->laibj', eye2, omega_bd).reshape(L, 2 * HD, 2 * HM)

    wo_f = params["Wo"].reshape(L, HD, D)                                   # (L, HD, D)

    # pack all per-layer 1xD vectors into one (L, 8, D) array
    vecs = jnp.concatenate(
        [params["bo"], params["g1"], params["be1"], params["b1"],
         params["b2"], params["g2"], params["be2"],
         jnp.zeros((L, 1, D), jnp.float32)], axis=1)                        # (L, 8, D)

    # ---- BlockSpecs: activations per batch row, everything else whole-array ----
    def full(shape):
        n = len(shape)
        return pl.BlockSpec(shape, lambda b, _n=n: (0,) * _n)

    in_specs = [
        pl.BlockSpec((1, S, D), lambda b: (b, 0, 0)),      # x0
        pl.BlockSpec((1, S, 1), lambda b: (b, 0, 0)),      # key length mask
        full((S, 2 * HD)),                                 # cos (tiled over q,k x heads)
        full((S, 2 * HD)),                                 # sin
        full((2 * HD, 2 * HD)),                            # rotate_half matrix
        full((HM, 2 * HD)),                                # head block mask (dup'd)
        full((L, D, QKV_PAD)),                             # fused Wqkv (+ zero ones-lanes)
        full((L, 1, QKV_PAD)),                             # fused bqkv (+ ones lanes)
        full((L, 2 * HD, 2 * HM)),                         # block-diag omega (q,k fused)
        full((L, HD, D)),                                  # fused Wo
        full((L, D, FF)),                                  # W1
        full((L, FF, D)),                                  # W2
        full((L, 8, D)),                                   # packed per-layer vectors
        full((1, D)), full((1, D)),                        # final LN gamma/beta
    ]
    out_specs = pl.BlockSpec((1, S, D), lambda b: (b, 0, 0))

    grid_spec = pltpu.PrefetchScalarGridSpec(
        num_scalar_prefetch=0,
        grid=(B,),
        in_specs=in_specs,
        out_specs=out_specs,
        scratch_shapes=[],
    )

    return pl.pallas_call(
        molformer_kernel,
        out_shape=jax.ShapeDtypeStruct((B, S, D), jnp.float32),
        grid_spec=grid_spec,
        compiler_params=pltpu.CompilerParams(
            dimension_semantics=("parallel",)),   # batch rows independent (v7x 2 TCs)
    )(x0, kmask, cos2, sin2, rot2, blk2,
      wqkv, bqkv, omega2, wo_f,
      params["W1"], params["W2"], vecs,
      params["gf"], params["bf"])


# ---------------- deterministic parameter init ----------------
def init_params(key):
    ks = jax.random.split(key, 10)
    n = lambda k, shape, std=0.02: (std * jax.random.normal(k, shape)).astype(jnp.float32)
    zeros = lambda shape: jnp.zeros(shape, jnp.float32)
    ones = lambda shape: jnp.ones(shape, jnp.float32)
    return dict(
        tok_emb=n(ks[0], (VOCAB, D)),
        Wq=n(ks[1], (L, H, D, DH)), bq=zeros((L, H, 1, DH)),
        Wk=n(ks[2], (L, H, D, DH)), bk=zeros((L, H, 1, DH)),
        Wv=n(ks[3], (L, H, D, DH)), bv=zeros((L, H, 1, DH)),
        omega=jax.random.normal(ks[4], (L, DH, M), dtype=jnp.float32),
        Wo=n(ks[5], (L, H, DH, D)), bo=zeros((L, 1, D)),
        g1=ones((L, 1, D)), be1=zeros((L, 1, D)),
        W1=n(ks[6], (L, D, FF)), b1=zeros((L, 1, FF)),
        W2=n(ks[7], (L, FF, D)), b2=zeros((L, 1, D)),
        g2=ones((L, 1, D)), be2=zeros((L, 1, D)),
        gf=ones((1, D)), bf=zeros((1, D)),
    )


# ---------------- pure-JAX reference (mirrors torch semantics) ----------------
def reference_forward(idx, mask, p):
    x = jnp.take(p["tok_emb"], idx, axis=0).astype(jnp.float32)
    lengths = jnp.sum(mask, axis=-1)
    kmask = (jnp.arange(S)[None, :] < lengths[:, None]).astype(jnp.float32)
    cos, sin = _rotary_tables(S, DH)
    cos4, sin4 = jnp.asarray(cos)[None, :, None, :], jnp.asarray(sin)[None, :, None, :]

    def rh(t):
        return jnp.concatenate([-t[..., DH // 2:], t[..., :DH // 2]], axis=-1)

    def ln(t, g, b):
        mu = t.mean(-1, keepdims=True)
        var = ((t - mu) ** 2).mean(-1, keepdims=True)
        return (t - mu) * lax.rsqrt(var + LN_EPS) * g + b

    for l in range(L):
        q = jnp.einsum('bsd,hde->bshe', x, p["Wq"][l]) + p["bq"][l].reshape(H, DH)[None, None]
        k = jnp.einsum('bsd,hde->bshe', x, p["Wk"][l]) + p["bk"][l].reshape(H, DH)[None, None]
        v = jnp.einsum('bsd,hde->bshe', x, p["Wv"][l]) + p["bv"][l].reshape(H, DH)[None, None]
        q = q * cos4 + rh(q) * sin4
        k = k * cos4 + rh(k) * sin4
        qf = jax.nn.relu(jnp.einsum('bshe,em->bshm', q, p["omega"][l]))
        kf = jax.nn.relu(jnp.einsum('bshe,em->bshm', k, p["omega"][l]))
        kf = kf * kmask[:, :, None, None]
        kv = jnp.einsum('bshm,bshv->bhvm', kf, v)
        z = 1.0 / (jnp.einsum('bshm,bhm->bsh', qf, kf.sum(1)) + ATTN_EPS)
        attn = jnp.einsum('bshm,bhvm->bshv', qf, kv) * z[..., None]
        attn_out = jnp.einsum('bshv,hvd->bsd', attn, p["Wo"][l]) + p["bo"][l]
        x = ln(x + attn_out, p["g1"][l], p["be1"][l])
        y = _gelu(jnp.einsum('bsd,df->bsf', x, p["W1"][l]) + p["b1"][l])
        y = jnp.einsum('bsf,fd->bsd', y, p["W2"][l]) + p["b2"][l]
        x = ln(x + y, p["g2"][l], p["be2"][l])
    return ln(x, p["gf"], p["bf"])


if __name__ == "__main__":
    key = jax.random.PRNGKey(0)
    k_idx, k_p = jax.random.split(key)
    idx = jax.random.randint(k_idx, (B, S), 0, VOCAB, dtype=jnp.int32)
    lengths = jnp.array([S, 5], dtype=jnp.int32)
    mask = (jnp.arange(S)[None, :] < lengths[:, None]).astype(jnp.int32)   # (B, S)

    params = init_params(k_p)

    out = molformer_forward(idx, mask, params)
    out = jax.block_until_ready(out)

    ref = reference_forward(idx, mask, params)
    assert out.shape == (B, S, D)
    assert bool(jnp.all(jnp.isfinite(out)))
    np.testing.assert_allclose(np.asarray(out), np.asarray(ref), rtol=2e-3, atol=2e-3)
    print("KERNEL_OK")
</pallas_src>

<mosaic_0001>
module attributes {stable_mosaic.version = 11 : i64} {
  func.func @molformer_kernel(%arg0: i32, %arg1: memref<1x8x32xf32, #tpu.memory_space<vmem>>, %arg2: memref<1x8x1xf32, #tpu.memory_space<vmem>>, %arg3: memref<8x64xf32, #tpu.memory_space<vmem>>, %arg4: memref<8x64xf32, #tpu.memory_space<vmem>>, %arg5: memref<64x64xf32, #tpu.memory_space<vmem>>, %arg6: memref<64x64xf32, #tpu.memory_space<vmem>>, %arg7: memref<2x32x128xf32, #tpu.memory_space<vmem>>, %arg8: memref<2x1x128xf32, #tpu.memory_space<vmem>>, %arg9: memref<2x64x128xf32, #tpu.memory_space<vmem>>, %arg10: memref<2x32x32xf32, #tpu.memory_space<vmem>>, %arg11: memref<2x32x32xf32, #tpu.memory_space<vmem>>, %arg12: memref<2x32x32xf32, #tpu.memory_space<vmem>>, %arg13: memref<2x8x32xf32, #tpu.memory_space<vmem>>, %arg14: memref<1x32xf32, #tpu.memory_space<vmem>>, %arg15: memref<1x32xf32, #tpu.memory_space<vmem>>, %arg16: memref<1x8x32xf32, #tpu.memory_space<vmem>>) attributes {dimension_semantics = [#tpu.dimension_semantics<parallel>], iteration_bounds = array<i64: 2>, scalar_prefetch = 0 : i64, scratch_operands = 0 : i64, tpu.core_type = #tpu.core_type<tc>, window_params = [{transform_indices = @transform_0, window_bounds = array<i64: 1, 8, 32>}, {transform_indices = @transform_1, window_bounds = array<i64: 1, 8, 1>}, {pipeline_mode = #tpu.pipeline_mode<synchronous>, transform_indices = @transform_2, window_bounds = array<i64: 8, 64>}, {pipeline_mode = #tpu.pipeline_mode<synchronous>, transform_indices = @transform_3, window_bounds = array<i64: 8, 64>}, {pipeline_mode = #tpu.pipeline_mode<synchronous>, transform_indices = @transform_4, window_bounds = array<i64: 64, 64>}, {pipeline_mode = #tpu.pipeline_mode<synchronous>, transform_indices = @transform_5, window_bounds = array<i64: 64, 64>}, {pipeline_mode = #tpu.pipeline_mode<synchronous>, transform_indices = @transform_6, window_bounds = array<i64: 2, 32, 128>}, {pipeline_mode = #tpu.pipeline_mode<synchronous>, transform_indices = @transform_7, window_bounds = array<i64: 2, 1, 128>}, {pipeline_mode = #tpu.pipeline_mode<synchronous>, transform_indices = @transform_8, window_bounds = array<i64: 2, 64, 128>}, {pipeline_mode = #tpu.pipeline_mode<synchronous>, transform_indices = @transform_9, window_bounds = array<i64: 2, 32, 32>}, {pipeline_mode = #tpu.pipeline_mode<synchronous>, transform_indices = @transform_10, window_bounds = array<i64: 2, 32, 32>}, {pipeline_mode = #tpu.pipeline_mode<synchronous>, transform_indices = @transform_11, window_bounds = array<i64: 2, 32, 32>}, {pipeline_mode = #tpu.pipeline_mode<synchronous>, transform_indices = @transform_12, window_bounds = array<i64: 2, 8, 32>}, {pipeline_mode = #tpu.pipeline_mode<synchronous>, transform_indices = @transform_13, window_bounds = array<i64: 1, 32>}, {pipeline_mode = #tpu.pipeline_mode<synchronous>, transform_indices = @transform_14, window_bounds = array<i64: 1, 32>}, {transform_indices = @transform_15, window_bounds = array<i64: 1, 8, 32>}]} {
    %c0 = arith.constant 0 : index
    %c0_0 = arith.constant 0 : index
    %c0_1 = arith.constant 0 : index
    %0 = vector.load %arg1[%c0, %c0_0, %c0_1] : memref<1x8x32xf32, #tpu.memory_space<vmem>>, vector<1x8x32xf32>
    %1 = vector.shape_cast %0 : vector<1x8x32xf32> to vector<8x32xf32>
    %c0_2 = arith.constant 0 : index
    %c0_3 = arith.constant 0 : index
    %c0_4 = arith.constant 0 : index
    %2 = vector.load %arg2[%c0_2, %c0_3, %c0_4] : memref<1x8x1xf32, #tpu.memory_space<vmem>>, vector<1x8x1xf32>
    %3 = vector.shape_cast %2 : vector<1x8x1xf32> to vector<8x1xf32>
    %c0_5 = arith.constant 0 : index
    %c0_6 = arith.constant 0 : index
    %4 = vector.load %arg3[%c0_5, %c0_6] : memref<8x64xf32, #tpu.memory_space<vmem>>, vector<8x64xf32>
    %c0_7 = arith.constant 0 : index
    %c0_8 = arith.constant 0 : index
    %5 = vector.load %arg4[%c0_7, %c0_8] : memref<8x64xf32, #tpu.memory_space<vmem>>, vector<8x64xf32>
    %c0_9 = arith.constant 0 : index
    %c0_10 = arith.constant 0 : index
    %6 = vector.load %arg5[%c0_9, %c0_10] : memref<64x64xf32, #tpu.memory_space<vmem>>, vector<64x64xf32>
    %c0_11 = arith.constant 0 : index
    %c0_12 = arith.constant 0 : index
    %7 = vector.load %arg6[%c0_11, %c0_12] : memref<64x64xf32, #tpu.memory_space<vmem>>, vector<64x64xf32>
    %c0_13 = arith.constant 0 : index
    %c0_14 = arith.constant 0 : index
    %c0_15 = arith.constant 0 : index
    %8 = vector.load %arg7[%c0_13, %c0_14, %c0_15] : memref<2x32x128xf32, #tpu.memory_space<vmem>>, vector<1x32x128xf32>
    %9 = vector.shape_cast %8 : vector<1x32x128xf32> to vector<32x128xf32>
    %cst = arith.constant dense<0.000000e+00> : vector<8x128xf32>
    %10 = tpu.matmul %1, %9, %cst {dimension_numbers = #tpu.dot_dimension_numbers<[1], [0], [0], [1], [0, 0, 1, 1], [], []>} : vector<8x32xf32>, vector<32x128xf32>, vector<8x128xf32> -> vector<8x128xf32>
    %c0_16 = arith.constant 0 : index
    %c0_17 = arith.constant 0 : index
    %c0_18 = arith.constant 0 : index
    %11 = vector.load %arg8[%c0_16, %c0_17, %c0_18] : memref<2x1x128xf32, #tpu.memory_space<vmem>>, vector<1x1x128xf32>
    %12 = vector.shape_cast %11 : vector<1x1x128xf32> to vector<1x128xf32>
    %13 = vector.broadcast %12 : vector<1x128xf32> to vector<8x128xf32>
    %14 = arith.addf %10, %13 : vector<8x128xf32>
    %15 = vector.extract_strided_slice %14 {offsets = [0, 0], sizes = [8, 64], strides = [1, 1]} : vector<8x128xf32> to vector<8x64xf32>
    %16 = vector.extract_strided_slice %14 {offsets = [0, 64], sizes = [8, 64], strides = [1, 1]} : vector<8x128xf32> to vector<8x64xf32>
    %17 = arith.mulf %15, %4 : vector<8x64xf32>
    %cst_19 = arith.constant dense<0.000000e+00> : vector<8x64xf32>
    %18 = tpu.matmul %15, %6, %cst_19 {dimension_numbers = #tpu.dot_dimension_numbers<[1], [0], [0], [1], [0, 0, 1, 1], [], []>} : vector<8x64xf32>, vector<64x64xf32>, vector<8x64xf32> -> vector<8x64xf32>
    %19 = arith.mulf %18, %5 : vector<8x64xf32>
    %20 = arith.addf %17, %19 : vector<8x64xf32>
    %c0_20 = arith.constant 0 : index
    %c0_21 = arith.constant 0 : index
    %c0_22 = arith.constant 0 : index
    %21 = vector.load %arg9[%c0_20, %c0_21, %c0_22] : memref<2x64x128xf32, #tpu.memory_space<vmem>>, vector<1x64x128xf32>
    %22 = vector.shape_cast %21 : vector<1x64x128xf32> to vector<64x128xf32>
    %cst_23 = arith.constant dense<0.000000e+00> : vector<8x128xf32>
    %23 = tpu.matmul %20, %22, %cst_23 {dimension_numbers = #tpu.dot_dimension_numbers<[1], [0], [0], [1], [0, 0, 1, 1], [], []>} : vector<8x64xf32>, vector<64x128xf32>, vector<8x128xf32> -> vector<8x128xf32>
    %cst_24 = arith.constant 0.000000e+00 : f32
    %24 = vector.broadcast %cst_24 : f32 to vector<8x128xf32>
    %25 = arith.maximumf %23, %24 : vector<8x128xf32>
    %26 = vector.extract_strided_slice %25 {offsets = [0, 0], sizes = [8, 64], strides = [1, 1]} : vector<8x128xf32> to vector<8x64xf32>
    %27 = vector.extract_strided_slice %25 {offsets = [0, 64], sizes = [8, 64], strides = [1, 1]} : vector<8x128xf32> to vector<8x64xf32>
    %28 = vector.broadcast %3 : vector<8x1xf32> to vector<8x64xf32>
    %29 = arith.mulf %27, %28 : vector<8x64xf32>
    %cst_25 = arith.constant dense<0.000000e+00> : vector<64x64xf32>
    %30 = tpu.matmul %29, %16, %cst_25 {dimension_numbers = #tpu.dot_dimension_numbers<[0], [0], [1], [1], [0, 1, 1, 1], [], []>} : vector<8x64xf32>, vector<8x64xf32>, vector<64x64xf32> -> vector<64x64xf32>
    %31 = arith.mulf %30, %7 : vector<64x64xf32>
    %cst_26 = arith.constant dense<0.000000e+00> : vector<8x64xf32>
    %32 = tpu.matmul %26, %31, %cst_26 {dimension_numbers = #tpu.dot_dimension_numbers<[1], [0], [0], [1], [0, 0, 1, 1], [], []>} : vector<8x64xf32>, vector<64x64xf32>, vector<8x64xf32> -> vector<8x64xf32>
    %33 = vector.extract_strided_slice %32 {offsets = [0, 0], sizes = [8, 32], strides = [1, 1]} : vector<8x64xf32> to vector<8x32xf32>
    %34 = vector.extract_strided_slice %32 {offsets = [0, 32], sizes = [8, 32], strides = [1, 1]} : vector<8x64xf32> to vector<8x32xf32>
    %cst_27 = arith.constant 9.99999997E-7 : f32
    %35 = vector.broadcast %cst_27 : f32 to vector<8x32xf32>
    %36 = arith.addf %34, %35 : vector<8x32xf32>
    %37 = tpu.reciprocal %36 {approx = true} : vector<8x32xf32> -> vector<8x32xf32>
    %38 = arith.mulf %33, %37 : vector<8x32xf32>
    %c0_28 = arith.constant 0 : index
    %c0_29 = arith.constant 0 : index
    %c0_30 = arith.constant 0 : index
    %39 = vector.load %arg13[%c0_28, %c0_29, %c0_30] : memref<2x8x32xf32, #tpu.memory_space<vmem>>, vector<1x8x32xf32>
    %40 = vector.shape_cast %39 : vector<1x8x32xf32> to vector<8x32xf32>
    %c0_31 = arith.constant 0 : index
    %c0_32 = arith.constant 0 : index
    %c0_33 = arith.constant 0 : index
    %41 = vector.load %arg10[%c0_31, %c0_32, %c0_33] : memref<2x32x32xf32, #tpu.memory_space<vmem>>, vector<1x32x32xf32>
    %42 = vector.shape_cast %41 : vector<1x32x32xf32> to vector<32x32xf32>
    %cst_34 = arith.constant dense<0.000000e+00> : vector<8x32xf32>
    %43 = tpu.matmul %38, %42, %cst_34 {dimension_numbers = #tpu.dot_dimension_numbers<[1], [0], [0], [1], [0, 0, 1, 1], [], []>} : vector<8x32xf32>, vector<32x32xf32>, vector<8x32xf32> -> vector<8x32xf32>
    %44 = vector.extract_strided_slice %40 {offsets = [0, 0], sizes = [1, 32], strides = [1, 1]} : vector<8x32xf32> to vector<1x32xf32>
    %45 = vector.broadcast %44 : vector<1x32xf32> to vector<8x32xf32>
    %46 = arith.addf %43, %45 : vector<8x32xf32>
    %47 = arith.addf %1, %46 : vector<8x32xf32>
    %48 = vector.extract_strided_slice %40 {offsets = [1, 0], sizes = [1, 32], strides = [1, 1]} : vector<8x32xf32> to vector<1x32xf32>
    %49 = vector.extract_strided_slice %40 {offsets = [2, 0], sizes = [1, 32], strides = [1, 1]} : vector<8x32xf32> to vector<1x32xf32>
    %cst_35 = arith.constant dense<0.000000e+00> : vector<8xf32>
    %50 = vector.multi_reduction <add>, %47, %cst_35 [1] : vector<8x32xf32> to vector<8xf32>
    %51 = vector.shape_cast %50 : vector<8xf32> to vector<8x1xf32>
    %cst_36 = arith.constant 3.200000e+01 : f32
    %52 = vector.broadcast %cst_36 : f32 to vector<8x1xf32>
    %53 = arith.divf %51, %52 : vector<8x1xf32>
    %54 = vector.broadcast %53 : vector<8x1xf32> to vector<8x32xf32>
    %55 = arith.subf %47, %54 : vector<8x32xf32>
    %56 = arith.mulf %55, %55 : vector<8x32xf32>
    %cst_37 = arith.constant dense<0.000000e+00> : vector<8xf32>
    %57 = vector.multi_reduction <add>, %56, %cst_37 [1] : vector<8x32xf32> to vector<8xf32>
    %58 = vector.shape_cast %57 : vector<8xf32> to vector<8x1xf32>
    %cst_38 = arith.constant 3.200000e+01 : f32
    %59 = vector.broadcast %cst_38 : f32 to vector<8x1xf32>
    %60 = arith.divf %58, %59 : vector<8x1xf32>
    %61 = vector.broadcast %53 : vector<8x1xf32> to vector<8x32xf32>
    %62 = arith.subf %47, %61 : vector<8x32xf32>
    %cst_39 = arith.constant 9.99999974E-6 : f32
    %63 = vector.broadcast %cst_39 : f32 to vector<8x1xf32>
    %64 = arith.addf %60, %63 : vector<8x1xf32>
    %65 = math.rsqrt %64 : vector<8x1xf32>
    %66 = vector.broadcast %65 : vector<8x1xf32> to vector<8x32xf32>
    %67 = arith.mulf %62, %66 : vector<8x32xf32>
    %68 = vector.broadcast %48 : vector<1x32xf32> to vector<8x32xf32>
    %69 = arith.mulf %67, %68 : vector<8x32xf32>
    %70 = vector.broadcast %49 : vector<1x32xf32> to vector<8x32xf32>
    %71 = arith.addf %69, %70 : vector<8x32xf32>
    %c0_40 = arith.constant 0 : index
    %c0_41 = arith.constant 0 : index
    %c0_42 = arith.constant 0 : index
    %72 = vector.load %arg11[%c0_40, %c0_41, %c0_42] : memref<2x32x32xf32, #tpu.memory_space<vmem>>, vector<1x32x32xf32>
    %73 = vector.shape_cast %72 : vector<1x32x32xf32> to vector<32x32xf32>
    %cst_43 = arith.constant dense<0.000000e+00> : vector<8x32xf32>
    %74 = tpu.matmul %71, %73, %cst_43 {dimension_numbers = #tpu.dot_dimension_numbers<[1], [0], [0], [1], [0, 0, 1, 1], [], []>} : vector<8x32xf32>, vector<32x32xf32>, vector<8x32xf32> -> vector<8x32xf32>
    %75 = vector.extract_strided_slice %40 {offsets = [3, 0], sizes = [1, 32], strides = [1, 1]} : vector<8x32xf32> to vector<1x32xf32>
    %76 = vector.broadcast %75 : vector<1x32xf32> to vector<8x32xf32>
    %77 = arith.addf %74, %76 : vector<8x32xf32>
    %cst_44 = arith.constant 5.000000e-01 : f32
    %78 = vector.broadcast %cst_44 : f32 to vector<8x32xf32>
    %79 = arith.mulf %78, %77 : vector<8x32xf32>
    %cst_45 = arith.constant 0.707106769 : f32
    %80 = vector.broadcast %cst_45 : f32 to vector<8x32xf32>
    %81 = arith.mulf %77, %80 : vector<8x32xf32>
    %82 = math.erf %81 : vector<8x32xf32>
    %cst_46 = arith.constant 1.000000e+00 : f32
    %83 = vector.broadcast %cst_46 : f32 to vector<8x32xf32>
    %84 = arith.addf %83, %82 : vector<8x32xf32>
    %85 = arith.mulf %79, %84 : vector<8x32xf32>
    %c0_47 = arith.constant 0 : index
    %c0_48 = arith.constant 0 : index
    %c0_49 = arith.constant 0 : index
    %86 = vector.load %arg12[%c0_47, %c0_48, %c0_49] : memref<2x32x32xf32, #tpu.memory_space<vmem>>, vector<1x32x32xf32>
    %87 = vector.shape_cast %86 : vector<1x32x32xf32> to vector<32x32xf32>
    %cst_50 = arith.constant dense<0.000000e+00> : vector<8x32xf32>
    %88 = tpu.matmul %85, %87, %cst_50 {dimension_numbers = #tpu.dot_dimension_numbers<[1], [0], [0], [1], [0, 0, 1, 1], [], []>} : vector<8x32xf32>, vector<32x32xf32>, vector<8x32xf32> -> vector<8x32xf32>
    %89 = vector.extract_strided_slice %40 {offsets = [4, 0], sizes = [1, 32], strides = [1, 1]} : vector<8x32xf32> to vector<1x32xf32>
    %90 = vector.broadcast %89 : vector<1x32xf32> to vector<8x32xf32>
    %91 = arith.addf %88, %90 : vector<8x32xf32>
    %92 = arith.addf %71, %91 : vector<8x32xf32>
    %93 = vector.extract_strided_slice %40 {offsets = [5, 0], sizes = [1, 32], strides = [1, 1]} : vector<8x32xf32> to vector<1x32xf32>
    %94 = vector.extract_strided_slice %40 {offsets = [6, 0], sizes = [1, 32], strides = [1, 1]} : vector<8x32xf32> to vector<1x32xf32>
    %cst_51 = arith.constant dense<0.000000e+00> : vector<8xf32>
    %95 = vector.multi_reduction <add>, %92, %cst_51 [1] : vector<8x32xf32> to vector<8xf32>
    %96 = vector.shape_cast %95 : vector<8xf32> to vector<8x1xf32>
    %cst_52 = arith.constant 3.200000e+01 : f32
    %97 = vector.broadcast %cst_52 : f32 to vector<8x1xf32>
    %98 = arith.divf %96, %97 : vector<8x1xf32>
    %99 = vector.broadcast %98 : vector<8x1xf32> to vector<8x32xf32>
    %100 = arith.subf %92, %99 : vector<8x32xf32>
    %101 = arith.mulf %100, %100 : vector<8x32xf32>
    %cst_53 = arith.constant dense<0.000000e+00> : vector<8xf32>
    %102 = vector.multi_reduction <add>, %101, %cst_53 [1] : vector<8x32xf32> to vector<8xf32>
    %103 = vector.shape_cast %102 : vector<8xf32> to vector<8x1xf32>
    %cst_54 = arith.constant 3.200000e+01 : f32
    %104 = vector.broadcast %cst_54 : f32 to vector<8x1xf32>
    %105 = arith.divf %103, %104 : vector<8x1xf32>
    %106 = vector.broadcast %98 : vector<8x1xf32> to vector<8x32xf32>
    %107 = arith.subf %92, %106 : vector<8x32xf32>
    %cst_55 = arith.constant 9.99999974E-6 : f32
    %108 = vector.broadcast %cst_55 : f32 to vector<8x1xf32>
    %109 = arith.addf %105, %108 : vector<8x1xf32>
    %110 = math.rsqrt %109 : vector<8x1xf32>
    %111 = vector.broadcast %110 : vector<8x1xf32> to vector<8x32xf32>
    %112 = arith.mulf %107, %111 : vector<8x32xf32>
    %113 = vector.broadcast %93 : vector<1x32xf32> to vector<8x32xf32>
    %114 = arith.mulf %112, %113 : vector<8x32xf32>
    %115 = vector.broadcast %94 : vector<1x32xf32> to vector<8x32xf32>
    %116 = arith.addf %114, %115 : vector<8x32xf32>
    %c1 = arith.constant 1 : index
    %c0_56 = arith.constant 0 : index
    %c0_57 = arith.constant 0 : index
    %117 = vector.load %arg7[%c1, %c0_56, %c0_57] : memref<2x32x128xf32, #tpu.memory_space<vmem>>, vector<1x32x128xf32>
    %118 = vector.shape_cast %117 : vector<1x32x128xf32> to vector<32x128xf32>
    %cst_58 = arith.constant dense<0.000000e+00> : vector<8x128xf32>
    %119 = tpu.matmul %116, %118, %cst_58 {dimension_numbers = #tpu.dot_dimension_numbers<[1], [0], [0], [1], [0, 0, 1, 1], [], []>} : vector<8x32xf32>, vector<32x128xf32>, vector<8x128xf32> -> vector<8x128xf32>
    %c1_59 = arith.constant 1 : index
    %c0_60 = arith.constant 0 : index
    %c0_61 = arith.constant 0 : index
    %120 = vector.load %arg8[%c1_59, %c0_60, %c0_61] : memref<2x1x128xf32, #tpu.memory_space<vmem>>, vector<1x1x128xf32>
    %121 = vector.shape_cast %120 : vector<1x1x128xf32> to vector<1x128xf32>
    %122 = vector.broadcast %121 : vector<1x128xf32> to vector<8x128xf32>
    %123 = arith.addf %119, %122 : vector<8x128xf32>
    %124 = vector.extract_strided_slice %123 {offsets = [0, 0], sizes = [8, 64], strides = [1, 1]} : vector<8x128xf32> to vector<8x64xf32>
    %125 = vector.extract_strided_slice %123 {offsets = [0, 64], sizes = [8, 64], strides = [1, 1]} : vector<8x128xf32> to vector<8x64xf32>
    %126 = arith.mulf %124, %4 : vector<8x64xf32>
    %cst_62 = arith.constant dense<0.000000e+00> : vector<8x64xf32>
    %127 = tpu.matmul %124, %6, %cst_62 {dimension_numbers = #tpu.dot_dimension_numbers<[1], [0], [0], [1], [0, 0, 1, 1], [], []>} : vector<8x64xf32>, vector<64x64xf32>, vector<8x64xf32> -> vector<8x64xf32>
    %128 = arith.mulf %127, %5 : vector<8x64xf32>
    %129 = arith.addf %126, %128 : vector<8x64xf32>
    %c1_63 = arith.constant 1 : index
    %c0_64 = arith.constant 0 : index
    %c0_65 = arith.constant 0 : index
    %130 = vector.load %arg9[%c1_63, %c0_64, %c0_65] : memref<2x64x128xf32, #tpu.memory_space<vmem>>, vector<1x64x128xf32>
    %131 = vector.shape_cast %130 : vector<1x64x128xf32> to vector<64x128xf32>
    %cst_66 = arith.constant dense<0.000000e+00> : vector<8x128xf32>
    %132 = tpu.matmul %129, %131, %cst_66 {dimension_numbers = #tpu.dot_dimension_numbers<[1], [0], [0], [1], [0, 0, 1, 1], [], []>} : vector<8x64xf32>, vector<64x128xf32>, vector<8x128xf32> -> vector<8x128xf32>
    %cst_67 = arith.constant 0.000000e+00 : f32
    %133 = vector.broadcast %cst_67 : f32 to vector<8x128xf32>
    %134 = arith.maximumf %132, %133 : vector<8x128xf32>
    %135 = vector.extract_strided_slice %134 {offsets = [0, 0], sizes = [8, 64], strides = [1, 1]} : vector<8x128xf32> to vector<8x64xf32>
    %136 = vector.extract_strided_slice %134 {offsets = [0, 64], sizes = [8, 64], strides = [1, 1]} : vector<8x128xf32> to vector<8x64xf32>
    %137 = vector.broadcast %3 : vector<8x1xf32> to vector<8x64xf32>
    %138 = arith.mulf %136, %137 : vector<8x64xf32>
    %cst_68 = arith.constant dense<0.000000e+00> : vector<64x64xf32>
    %139 = tpu.matmul %138, %125, %cst_68 {dimension_numbers = #tpu.dot_dimension_numbers<[0], [0], [1], [1], [0, 1, 1, 1], [], []>} : vector<8x64xf32>, vector<8x64xf32>, vector<64x64xf32> -> vector<64x64xf32>
    %140 = arith.mulf %139, %7 : vector<64x64xf32>
    %cst_69 = arith.constant dense<0.000000e+00> : vector<8x64xf32>
    %141 = tpu.matmul %135, %140, %cst_69 {dimension_numbers = #tpu.dot_dimension_numbers<[1], [0], [0], [1], [0, 0, 1, 1], [], []>} : vector<8x64xf32>, vector<64x64xf32>, vector<8x64xf32> -> vector<8x64xf32>
    %142 = vector.extract_strided_slice %141 {offsets = [0, 0], sizes = [8, 32], strides = [1, 1]} : vector<8x64xf32> to vector<8x32xf32>
    %143 = vector.extract_strided_slice %141 {offsets = [0, 32], sizes = [8, 32], strides = [1, 1]} : vector<8x64xf32> to vector<8x32xf32>
    %cst_70 = arith.constant 9.99999997E-7 : f32
    %144 = vector.broadcast %cst_70 : f32 to vector<8x32xf32>
    %145 = arith.addf %143, %144 : vector<8x32xf32>
    %146 = tpu.reciprocal %145 {approx = true} : vector<8x32xf32> -> vector<8x32xf32>
    %147 = arith.mulf %142, %146 : vector<8x32xf32>
    %c1_71 = arith.constant 1 : index
    %c0_72 = arith.constant 0 : index
    %c0_73 = arith.constant 0 : index
    %148 = vector.load %arg13[%c1_71, %c0_72, %c0_73] : memref<2x8x32xf32, #tpu.memory_space<vmem>>, vector<1x8x32xf32>
    %149 = vector.shape_cast %148 : vector<1x8x32xf32> to vector<8x32xf32>
    %c1_74 = arith.constant 1 : index
    %c0_75 = arith.constant 0 : index
    %c0_76 = arith.constant 0 : index
    %150 = vector.load %arg10[%c1_74, %c0_75, %c0_76] : memref<2x32x32xf32, #tpu.memory_space<vmem>>, vector<1x32x32xf32>
    %151 = vector.shape_cast %150 : vector<1x32x32xf32> to vector<32x32xf32>
    %cst_77 = arith.constant dense<0.000000e+00> : vector<8x32xf32>
    %152 = tpu.matmul %147, %151, %cst_77 {dimension_numbers = #tpu.dot_dimension_numbers<[1], [0], [0], [1], [0, 0, 1, 1], [], []>} : vector<8x32xf32>, vector<32x32xf32>, vector<8x32xf32> -> vector<8x32xf32>
    %153 = vector.extract_strided_slice %149 {offsets = [0, 0], sizes = [1, 32], strides = [1, 1]} : vector<8x32xf32> to vector<1x32xf32>
    %154 = vector.broadcast %153 : vector<1x32xf32> to vector<8x32xf32>
    %155 = arith.addf %152, %154 : vector<8x32xf32>
    %156 = arith.addf %116, %155 : vector<8x32xf32>
    %157 = vector.extract_strided_slice %149 {offsets = [1, 0], sizes = [1, 32], strides = [1, 1]} : vector<8x32xf32> to vector<1x32xf32>
    %158 = vector.extract_strided_slice %149 {offsets = [2, 0], sizes = [1, 32], strides = [1, 1]} : vector<8x32xf32> to vector<1x32xf32>
    %cst_78 = arith.constant dense<0.000000e+00> : vector<8xf32>
    %159 = vector.multi_reduction <add>, %156, %cst_78 [1] : vector<8x32xf32> to vector<8xf32>
    %160 = vector.shape_cast %159 : vector<8xf32> to vector<8x1xf32>
    %cst_79 = arith.constant 3.200000e+01 : f32
    %161 = vector.broadcast %cst_79 : f32 to vector<8x1xf32>
    %162 = arith.divf %160, %161 : vector<8x1xf32>
    %163 = vector.broadcast %162 : vector<8x1xf32> to vector<8x32xf32>
    %164 = arith.subf %156, %163 : vector<8x32xf32>
    %165 = arith.mulf %164, %164 : vector<8x32xf32>
    %cst_80 = arith.constant dense<0.000000e+00> : vector<8xf32>
    %166 = vector.multi_reduction <add>, %165, %cst_80 [1] : vector<8x32xf32> to vector<8xf32>
    %167 = vector.shape_cast %166 : vector<8xf32> to vector<8x1xf32>
    %cst_81 = arith.constant 3.200000e+01 : f32
    %168 = vector.broadcast %cst_81 : f32 to vector<8x1xf32>
    %169 = arith.divf %167, %168 : vector<8x1xf32>
    %170 = vector.broadcast %162 : vector<8x1xf32> to vector<8x32xf32>
    %171 = arith.subf %156, %170 : vector<8x32xf32>
    %cst_82 = arith.constant 9.99999974E-6 : f32
    %172 = vector.broadcast %cst_82 : f32 to vector<8x1xf32>
    %173 = arith.addf %169, %172 : vector<8x1xf32>
    %174 = math.rsqrt %173 : vector<8x1xf32>
    %175 = vector.broadcast %174 : vector<8x1xf32> to vector<8x32xf32>
    %176 = arith.mulf %171, %175 : vector<8x32xf32>
    %177 = vector.broadcast %157 : vector<1x32xf32> to vector<8x32xf32>
    %178 = arith.mulf %176, %177 : vector<8x32xf32>
    %179 = vector.broadcast %158 : vector<1x32xf32> to vector<8x32xf32>
    %180 = arith.addf %178, %179 : vector<8x32xf32>
    %c1_83 = arith.constant 1 : index
    %c0_84 = arith.constant 0 : index
    %c0_85 = arith.constant 0 : index
    %181 = vector.load %arg11[%c1_83, %c0_84, %c0_85] : memref<2x32x32xf32, #tpu.memory_space<vmem>>, vector<1x32x32xf32>
    %182 = vector.shape_cast %181 : vector<1x32x32xf32> to vector<32x32xf32>
    %cst_86 = arith.constant dense<0.000000e+00> : vector<8x32xf32>
    %183 = tpu.matmul %180, %182, %cst_86 {dimension_numbers = #tpu.dot_dimension_numbers<[1], [0], [0], [1], [0, 0, 1, 1], [], []>} : vector<8x32xf32>, vector<32x32xf32>, vector<8x32xf32> -> vector<8x32xf32>
    %184 = vector.extract_strided_slice %149 {offsets = [3, 0], sizes = [1, 32], strides = [1, 1]} : vector<8x32xf32> to vector<1x32xf32>
    %185 = vector.broadcast %184 : vector<1x32xf32> to vector<8x32xf32>
    %186 = arith.addf %183, %185 : vector<8x32xf32>
    %cst_87 = arith.constant 5.000000e-01 : f32
    %187 = vector.broadcast %cst_87 : f32 to vector<8x32xf32>
    %188 = arith.mulf %187, %186 : vector<8x32xf32>
    %cst_88 = arith.constant 0.707106769 : f32
    %189 = vector.broadcast %cst_88 : f32 to vector<8x32xf32>
    %190 = arith.mulf %186, %189 : vector<8x32xf32>
    %191 = math.erf %190 : vector<8x32xf32>
    %cst_89 = arith.constant 1.000000e+00 : f32
    %192 = vector.broadcast %cst_89 : f32 to vector<8x32xf32>
    %193 = arith.addf %192, %191 : vector<8x32xf32>
    %194 = arith.mulf %188, %193 : vector<8x32xf32>
    %c1_90 = arith.constant 1 : index
    %c0_91 = arith.constant 0 : index
    %c0_92 = arith.constant 0 : index
    %195 = vector.load %arg12[%c1_90, %c0_91, %c0_92] : memref<2x32x32xf32, #tpu.memory_space<vmem>>, vector<1x32x32xf32>
    %196 = vector.shape_cast %195 : vector<1x32x32xf32> to vector<32x32xf32>
    %cst_93 = arith.constant dense<0.000000e+00> : vector<8x32xf32>
    %197 = tpu.matmul %194, %196, %cst_93 {dimension_numbers = #tpu.dot_dimension_numbers<[1], [0], [0], [1], [0, 0, 1, 1], [], []>} : vector<8x32xf32>, vector<32x32xf32>, vector<8x32xf32> -> vector<8x32xf32>
    %198 = vector.extract_strided_slice %149 {offsets = [4, 0], sizes = [1, 32], strides = [1, 1]} : vector<8x32xf32> to vector<1x32xf32>
    %199 = vector.broadcast %198 : vector<1x32xf32> to vector<8x32xf32>
    %200 = arith.addf %197, %199 : vector<8x32xf32>
    %201 = arith.addf %180, %200 : vector<8x32xf32>
    %202 = vector.extract_strided_slice %149 {offsets = [5, 0], sizes = [1, 32], strides = [1, 1]} : vector<8x32xf32> to vector<1x32xf32>
    %203 = vector.extract_strided_slice %149 {offsets = [6, 0], sizes = [1, 32], strides = [1, 1]} : vector<8x32xf32> to vector<1x32xf32>
    %cst_94 = arith.constant dense<0.000000e+00> : vector<8xf32>
    %204 = vector.multi_reduction <add>, %201, %cst_94 [1] : vector<8x32xf32> to vector<8xf32>
    %205 = vector.shape_cast %204 : vector<8xf32> to vector<8x1xf32>
    %cst_95 = arith.constant 3.200000e+01 : f32
    %206 = vector.broadcast %cst_95 : f32 to vector<8x1xf32>
    %207 = arith.divf %205, %206 : vector<8x1xf32>
    %208 = vector.broadcast %207 : vector<8x1xf32> to vector<8x32xf32>
    %209 = arith.subf %201, %208 : vector<8x32xf32>
    %210 = arith.mulf %209, %209 : vector<8x32xf32>
    %cst_96 = arith.constant dense<0.000000e+00> : vector<8xf32>
    %211 = vector.multi_reduction <add>, %210, %cst_96 [1] : vector<8x32xf32> to vector<8xf32>
    %212 = vector.shape_cast %211 : vector<8xf32> to vector<8x1xf32>
    %cst_97 = arith.constant 3.200000e+01 : f32
    %213 = vector.broadcast %cst_97 : f32 to vector<8x1xf32>
    %214 = arith.divf %212, %213 : vector<8x1xf32>
    %215 = vector.broadcast %207 : vector<8x1xf32> to vector<8x32xf32>
    %216 = arith.subf %201, %215 : vector<8x32xf32>
    %cst_98 = arith.constant 9.99999974E-6 : f32
    %217 = vector.broadcast %cst_98 : f32 to vector<8x1xf32>
    %218 = arith.addf %214, %217 : vector<8x1xf32>
    %219 = math.rsqrt %218 : vector<8x1xf32>
    %220 = vector.broadcast %219 : vector<8x1xf32> to vector<8x32xf32>
    %221 = arith.mulf %216, %220 : vector<8x32xf32>
    %222 = vector.broadcast %202 : vector<1x32xf32> to vector<8x32xf32>
    %223 = arith.mulf %221, %222 : vector<8x32xf32>
    %224 = vector.broadcast %203 : vector<1x32xf32> to vector<8x32xf32>
    %225 = arith.addf %223, %224 : vector<8x32xf32>
    %c0_99 = arith.constant 0 : index
    %c0_100 = arith.constant 0 : index
    %226 = vector.load %arg14[%c0_99, %c0_100] : memref<1x32xf32, #tpu.memory_space<vmem>>, vector<1x32xf32>
    %c0_101 = arith.constant 0 : index
    %c0_102 = arith.constant 0 : index
    %227 = vector.load %arg15[%c0_101, %c0_102] : memref<1x32xf32, #tpu.memory_space<vmem>>, vector<1x32xf32>
    %cst_103 = arith.constant dense<0.000000e+00> : vector<8xf32>
    %228 = vector.multi_reduction <add>, %225, %cst_103 [1] : vector<8x32xf32> to vector<8xf32>
    %229 = vector.shape_cast %228 : vector<8xf32> to vector<8x1xf32>
    %cst_104 = arith.constant 3.200000e+01 : f32
    %230 = vector.broadcast %cst_104 : f32 to vector<8x1xf32>
    %231 = arith.divf %229, %230 : vector<8x1xf32>
    %232 = vector.broadcast %231 : vector<8x1xf32> to vector<8x32xf32>
    %233 = arith.subf %225, %232 : vector<8x32xf32>
    %234 = arith.mulf %233, %233 : vector<8x32xf32>
    %cst_105 = arith.constant dense<0.000000e+00> : vector<8xf32>
    %235 = vector.multi_reduction <add>, %234, %cst_105 [1] : vector<8x32xf32> to vector<8xf32>
    %236 = vector.shape_cast %235 : vector<8xf32> to vector<8x1xf32>
    %cst_106 = arith.constant 3.200000e+01 : f32
    %237 = vector.broadcast %cst_106 : f32 to vector<8x1xf32>
    %238 = arith.divf %236, %237 : vector<8x1xf32>
    %239 = vector.broadcast %231 : vector<8x1xf32> to vector<8x32xf32>
    %240 = arith.subf %225, %239 : vector<8x32xf32>
    %cst_107 = arith.constant 9.99999974E-6 : f32
    %241 = vector.broadcast %cst_107 : f32 to vector<8x1xf32>
    %242 = arith.addf %238, %241 : vector<8x1xf32>
    %243 = math.rsqrt %242 : vector<8x1xf32>
    %244 = vector.broadcast %243 : vector<8x1xf32> to vector<8x32xf32>
    %245 = arith.mulf %240, %244 : vector<8x32xf32>
    %246 = vector.broadcast %226 : vector<1x32xf32> to vector<8x32xf32>
    %247 = arith.mulf %245, %246 : vector<8x32xf32>
    %248 = vector.broadcast %227 : vector<1x32xf32> to vector<8x32xf32>
    %249 = arith.addf %247, %248 : vector<8x32xf32>
    %c0_108 = arith.constant 0 : index
    %c0_109 = arith.constant 0 : index
    %c0_110 = arith.constant 0 : index
    %250 = vector.load %arg16[%c0_108, %c0_109, %c0_110] : memref<1x8x32xf32, #tpu.memory_space<vmem>>, vector<1x8x32xf32>
    %251 = vector.shape_cast %250 : vector<1x8x32xf32> to vector<8x32xf32>
    %252 = vector.shape_cast %249 : vector<8x32xf32> to vector<1x8x32xf32>
    tpu.vector_store %arg16[%c0_108, %c0_109, %c0_110], %252 {strides = array<i32>} : memref<1x8x32xf32, #tpu.memory_space<vmem>>, vector<1x8x32xf32>,
    return
  }
  func.func @transform_0(%arg0: i32) -> (i32, i32, i32) {
    %c0_i32 = arith.constant 0 : i32
    %c0_i32_0 = arith.constant 0 : i32
    %c0_i32_1 = arith.constant 0 : i32
    return %arg0, %c0_i32, %c0_i32_0 : i32, i32, i32
  }
  func.func @transform_1(%arg0: i32) -> (i32, i32, i32) {
    %c0_i32 = arith.constant 0 : i32
    %c0_i32_0 = arith.constant 0 : i32
    %c0_i32_1 = arith.constant 0 : i32
    return %arg0, %c0_i32, %c0_i32_0 : i32, i32, i32
  }
  func.func @transform_2(%arg0: i32) -> (i32, i32) {
    %c0_i32 = arith.constant 0 : i32
    %c0_i32_0 = arith.constant 0 : i32
    %c0_i32_1 = arith.constant 0 : i32
    return %c0_i32, %c0_i32_0 : i32, i32
  }
  func.func @transform_3(%arg0: i32) -> (i32, i32) {
    %c0_i32 = arith.constant 0 : i32
    %c0_i32_0 = arith.constant 0 : i32
    %c0_i32_1 = arith.constant 0 : i32
    return %c0_i32, %c0_i32_0 : i32, i32
  }
  func.func @transform_4(%arg0: i32) -> (i32, i32) {
    %c0_i32 = arith.constant 0 : i32
    %c0_i32_0 = arith.constant 0 : i32
    %c0_i32_1 = arith.constant 0 : i32
    return %c0_i32, %c0_i32_0 : i32, i32
  }
  func.func @transform_5(%arg0: i32) -> (i32, i32) {
    %c0_i32 = arith.constant 0 : i32
    %c0_i32_0 = arith.constant 0 : i32
    %c0_i32_1 = arith.constant 0 : i32
    return %c0_i32, %c0_i32_0 : i32, i32
  }
  func.func @transform_6(%arg0: i32) -> (i32, i32, i32) {
    %c0_i32 = arith.constant 0 : i32
    %c0_i32_0 = arith.constant 0 : i32
    %c0_i32_1 = arith.constant 0 : i32
    %c0_i32_2 = arith.constant 0 : i32
    return %c0_i32, %c0_i32_0, %c0_i32_1 : i32, i32, i32
  }
  func.func @transform_7(%arg0: i32) -> (i32, i32, i32) {
    %c0_i32 = arith.constant 0 : i32
    %c0_i32_0 = arith.constant 0 : i32
    %c0_i32_1 = arith.constant 0 : i32
    %c0_i32_2 = arith.constant 0 : i32
    return %c0_i32, %c0_i32_0, %c0_i32_1 : i32, i32, i32
  }
  func.func @transform_8(%arg0: i32) -> (i32, i32, i32) {
    %c0_i32 = arith.constant 0 : i32
    %c0_i32_0 = arith.constant 0 : i32
    %c0_i32_1 = arith.constant 0 : i32
    %c0_i32_2 = arith.constant 0 : i32
    return %c0_i32, %c0_i32_0, %c0_i32_1 : i32, i32, i32
  }
  func.func @transform_9(%arg0: i32) -> (i32, i32, i32) {
    %c0_i32 = arith.constant 0 : i32
    %c0_i32_0 = arith.constant 0 : i32
    %c0_i32_1 = arith.constant 0 : i32
    %c0_i32_2 = arith.constant 0 : i32
    return %c0_i32, %c0_i32_0, %c0_i32_1 : i32, i32, i32
  }
  func.func @transform_10(%arg0: i32) -> (i32, i32, i32) {
    %c0_i32 = arith.constant 0 : i32
    %c0_i32_0 = arith.constant 0 : i32
    %c0_i32_1 = arith.constant 0 : i32
    %c0_i32_2 = arith.constant 0 : i32
    return %c0_i32, %c0_i32_0, %c0_i32_1 : i32, i32, i32
  }
  func.func @transform_11(%arg0: i32) -> (i32, i32, i32) {
    %c0_i32 = arith.constant 0 : i32
    %c0_i32_0 = arith.constant 0 : i32
    %c0_i32_1 = arith.constant 0 : i32
    %c0_i32_2 = arith.constant 0 : i32
    return %c0_i32, %c0_i32_0, %c0_i32_1 : i32, i32, i32
  }
  func.func @transform_12(%arg0: i32) -> (i32, i32, i32) {
    %c0_i32 = arith.constant 0 : i32
    %c0_i32_0 = arith.constant 0 : i32
    %c0_i32_1 = arith.constant 0 : i32
    %c0_i32_2 = arith.constant 0 : i32
    return %c0_i32, %c0_i32_0, %c0_i32_1 : i32, i32, i32
  }
  func.func @transform_13(%arg0: i32) -> (i32, i32) {
    %c0_i32 = arith.constant 0 : i32
    %c0_i32_0 = arith.constant 0 : i32
    %c0_i32_1 = arith.constant 0 : i32
    return %c0_i32, %c0_i32_0 : i32, i32
  }
  func.func @transform_14(%arg0: i32) -> (i32, i32) {
    %c0_i32 = arith.constant 0 : i32
    %c0_i32_0 = arith.constant 0 : i32
    %c0_i32_1 = arith.constant 0 : i32
    return %c0_i32, %c0_i32_0 : i32, i32
  }
  func.func @transform_15(%arg0: i32) -> (i32, i32, i32) {
    %c0_i32 = arith.constant 0 : i32
    %c0_i32_0 = arith.constant 0 : i32
    %c0_i32_1 = arith.constant 0 : i32
    return %arg0, %c0_i32, %c0_i32_0 : i32, i32, i32
  }
}

</mosaic_0001>

<llo_original>
// kernel: molformer_forward.1
$region0: #{molformer_forward.1}
  #allocation0 [shape = 'u32[]', space=smem, size = 0x4, offset = 0x4, fixed_abs, tag = 'smem constant byte address 0x4 - core index']
  #allocation1 [shape = 'u32[72,128]{1,0:T(1,128)}', space=vmem, size = 0x9000, scoped, tag = 'internal scratch']
  %s0 = inlined_call_operand.vmem [shape: f32[2,8,32], index: 0, kind: input, shape index: {}]
  %s1 = inlined_call_operand.vmem [shape: f32[2,8,1], index: 1, kind: input, shape index: {}]
  %s2 = inlined_call_operand.vmem [shape: f32[8,64], index: 2, kind: input, shape index: {}]
  %s3 = inlined_call_operand.vmem [shape: f32[8,64], index: 3, kind: input, shape index: {}]
  %s4 = inlined_call_operand.vmem [shape: f32[64,64], index: 4, kind: input, shape index: {}]
  %s5 = inlined_call_operand.vmem [shape: f32[64,64], index: 5, kind: input, shape index: {}]
  %s6 = inlined_call_operand.vmem [shape: f32[2,32,128], index: 6, kind: input, shape index: {}]
  %s7 = inlined_call_operand.vmem [shape: f32[2,1,128], index: 7, kind: input, shape index: {}]
  %s8 = inlined_call_operand.vmem [shape: f32[2,64,128], index: 8, kind: input, shape index: {}]
  %s9 = inlined_call_operand.vmem [shape: f32[2,32,32], index: 9, kind: input, shape index: {}]
  %s10 = inlined_call_operand.vmem [shape: f32[2,32,32], index: 10, kind: input, shape index: {}]
  %s11 = inlined_call_operand.vmem [shape: f32[2,32,32], index: 11, kind: input, shape index: {}]
  %s12 = inlined_call_operand.vmem [shape: f32[2,8,32], index: 12, kind: input, shape index: {}]
  %s13 = inlined_call_operand.vmem [shape: f32[1,32], index: 13, kind: input, shape index: {}]
  %s14 = inlined_call_operand.vmem [shape: f32[1,32], index: 14, kind: input, shape index: {}]
  %s15 = inlined_call_operand.hbm [shape: f32[2,8,32], index: 15, kind: output, shape index: {}]
  %s16 = sld [smem:[#allocation0]]
  $region93: #{molformer_forward.1} parent=0
    _
  %s18 = ssub.s32 1, %s16
  %s19 = scalar_select 0, %s18, %s16
  $region1: #{molformer_forward.1} parent=0
    #allocation2 [shape = 'u8[8192]{0}', space=vmem, size = 0x2000, scoped, tag = 'output window, operand 0']
    #allocation3 [shape = 's32[2]{0}', space=sflag, size = 0x8, scoped, tag = 'scoped memory for molformer_forward.1']
    %20 = vsyncpa [#allocation3], 0
    %s21 = scalar_lea.sflag [#allocation3], 1
    %22 = vsyncpa %s21, 0
    loop: start=0, step=1, limit=4
    $region2: #{molformer_forward.1} parent=1 // loop_pre_header
      _
    $region3: #{molformer_forward.1} parent=1 // loop_header
      %s24 = sphi 0, %s28
      %p25 = scmp.ge.s32.totalorder %s24, 4
      %s34 = sphi 0, %s36
      %s37 = sphi 0, %s34
      %s38 = sphi 0, %s37
      %s54 = sphi 0, %s38
      %s60 = sphi 0, %s62
      %s63 = sphi 0, %s60
      %s64 = sphi 0, %s63
      %s80 = sphi 0, %s64
      %s84 = sphi 0, %s84
      %s86 = sphi 0, %s84
      %s87 = sphi 0, %s86
      %s101 = sphi 0, %s87
      %s105 = sphi 0, %s105
      %s107 = sphi 0, %s105
      %s108 = sphi 0, %s107
      %s122 = sphi 0, %s108
      %s126 = sphi 0, %s126
      %s128 = sphi 0, %s126
      %s129 = sphi 0, %s128
      %s143 = sphi 0, %s129
      %s147 = sphi 0, %s147
      %s149 = sphi 0, %s147
      %s150 = sphi 0, %s149
      %s164 = sphi 0, %s150
      %s168 = sphi 0, %s168
      %s170 = sphi 0, %s168
      %s171 = sphi 0, %s170
      %s185 = sphi 0, %s171
      %s189 = sphi 0, %s189
      %s191 = sphi 0, %s189
      %s192 = sphi 0, %s191
      %s206 = sphi 0, %s192
      %s210 = sphi 0, %s210
      %s212 = sphi 0, %s210
      %s213 = sphi 0, %s212
      %s227 = sphi 0, %s213
      %s231 = sphi 0, %s231
      %s233 = sphi 0, %s231
      %s234 = sphi 0, %s233
      %s248 = sphi 0, %s234
      %s252 = sphi 0, %s252
      %s254 = sphi 0, %s252
      %s255 = sphi 0, %s254
      %s269 = sphi 0, %s255
      %s273 = sphi 0, %s273
      %s275 = sphi 0, %s273
      %s276 = sphi 0, %s275
      %s290 = sphi 0, %s276
      %s294 = sphi 0, %s294
      %s296 = sphi 0, %s294
      %s297 = sphi 0, %s296
      %s311 = sphi 0, %s297
      %s315 = sphi 0, %s315
      %s317 = sphi 0, %s315
      %s318 = sphi 0, %s317
      %s332 = sphi 0, %s318
      %s336 = sphi 0, %s336
      %s338 = sphi 0, %s336
      %s339 = sphi 0, %s338
      %s353 = sphi 0, %s339
      %s359 = sphi 0, %s361
      %s362 = sphi 0, %s359
      %s363 = sphi 0, %s362
      %s379 = sphi 0, %s363
    $region4: #{molformer_forward.1} parent=1 // loop_header_branch
      %27 = sbr.rel (%p25) target = $region8
    $region5: #{molformer_forward.1} parent=1 // loop_body
      %s29 = ssub.s32 %s24, 1
      %s30 = ssub.s32 %s24, 2
      %s31 = sadd.s32 %s24, 1
      %s32 = ssub.s32 %s24, %s31
      %p33 = scmp.eq.s32.totalorder %s32, 0
      %s35 = sadd.s32 %s34, 1
      %s36 = scalar_select %p33, %s34, %s35
      %p39 = pneg %p33
      %p40 = scmp.eq.s32.totalorder %s24, 1
      %p41 = por %p39, %p40
      %p42 = scmp.ne.s32.totalorder %s34, %s37
      %p43 = scmp.eq.s32.totalorder %s24, 0
      %p44 = por %p42, %p43
      %p45 = scmp.ne.s32.totalorder %s34, %s37
      %p46 = scmp.eq.s32.totalorder %s29, 1
      %p47 = por %p45, %p46
      %p48 = scmp.ne.s32.totalorder %s37, %s38
      %p49 = scmp.eq.s32.totalorder %s29, 0
      %p50 = por %p48, %p49
      %p51 = scmp.ne.s32.totalorder %s37, %s38
      %p52 = scmp.eq.s32.totalorder %s30, 1
      %p53 = por %p51, %p52
      %p55 = scmp.ne.s32.totalorder %s38, %s54
      %p56 = scmp.eq.s32.totalorder %s30, 0
      %p57 = por %p55, %p56
      %s58 = ssub.s32 %s24, %s31
      %p59 = scmp.eq.s32.totalorder %s58, 0
      %s61 = sadd.s32 %s60, 1
      %s62 = scalar_select %p59, %s60, %s61
      %p65 = pneg %p59
      %p66 = scmp.eq.s32.totalorder %s24, 1
      %p67 = por %p65, %p66
      %p68 = scmp.ne.s32.totalorder %s60, %s63
      %p69 = scmp.eq.s32.totalorder %s24, 0
      %p70 = por %p68, %p69
      %p71 = scmp.ne.s32.totalorder %s60, %s63
      %p72 = scmp.eq.s32.totalorder %s29, 1
      %p73 = por %p71, %p72
      %p74 = scmp.ne.s32.totalorder %s63, %s64
      %p75 = scmp.eq.s32.totalorder %s29, 0
      %p76 = por %p74, %p75
      %p77 = scmp.ne.s32.totalorder %s63, %s64
      %p78 = scmp.eq.s32.totalorder %s30, 1
      %p79 = por %p77, %p78
      %p81 = scmp.ne.s32.totalorder %s64, %s80
      %p82 = scmp.eq.s32.totalorder %s30, 0
      %p83 = por %p81, %p82
      %s85 = sadd.s32 %s84, 1
      %p88 = scmp.eq.s32.totalorder %s24, 1
      %p89 = scmp.ne.s32.totalorder %s84, %s86
      %p90 = scmp.eq.s32.totalorder %s24, 0
      %p91 = por %p89, %p90
      %p92 = scmp.ne.s32.totalorder %s84, %s86
      %p93 = scmp.eq.s32.totalorder %s29, 1
      %p94 = por %p92, %p93
      %p95 = scmp.ne.s32.totalorder %s86, %s87
      %p96 = scmp.eq.s32.totalorder %s29, 0
      %p97 = por %p95, %p96
      %p98 = scmp.ne.s32.totalorder %s86, %s87
      %p99 = scmp.eq.s32.totalorder %s30, 1
      %p100 = por %p98, %p99
      %p102 = scmp.ne.s32.totalorder %s87, %s101
      %p103 = scmp.eq.s32.totalorder %s30, 0
      %p104 = por %p102, %p103
      %s106 = sadd.s32 %s105, 1
      %p109 = scmp.eq.s32.totalorder %s24, 1
      %p110 = scmp.ne.s32.totalorder %s105, %s107
      %p111 = scmp.eq.s32.totalorder %s24, 0
      %p112 = por %p110, %p111
      %p113 = scmp.ne.s32.totalorder %s105, %s107
      %p114 = scmp.eq.s32.totalorder %s29, 1
      %p115 = por %p113, %p114
      %p116 = scmp.ne.s32.totalorder %s107, %s108
      %p117 = scmp.eq.s32.totalorder %s29, 0
      %p118 = por %p116, %p117
      %p119 = scmp.ne.s32.totalorder %s107, %s108
      %p120 = scmp.eq.s32.totalorder %s30, 1
      %p121 = por %p119, %p120
      %p123 = scmp.ne.s32.totalorder %s108, %s122
      %p124 = scmp.eq.s32.totalorder %s30, 0
      %p125 = por %p123, %p124
      %s127 = sadd.s32 %s126, 1
      %p130 = scmp.eq.s32.totalorder %s24, 1
      %p131 = scmp.ne.s32.totalorder %s126, %s128
      %p132 = scmp.eq.s32.totalorder %s24, 0
      %p133 = por %p131, %p132
      %p134 = scmp.ne.s32.totalorder %s126, %s128
      %p135 = scmp.eq.s32.totalorder %s29, 1
      %p136 = por %p134, %p135
      %p137 = scmp.ne.s32.totalorder %s128, %s129
      %p138 = scmp.eq.s32.totalorder %s29, 0
      %p139 = por %p137, %p138
      %p140 = scmp.ne.s32.totalorder %s128, %s129
      %p141 = scmp.eq.s32.totalorder %s30, 1
      %p142 = por %p140, %p141
      %p144 = scmp.ne.s32.totalorder %s129, %s143
      %p145 = scmp.eq.s32.totalorder %s30, 0
      %p146 = por %p144, %p145
      %s148 = sadd.s32 %s147, 1
      %p151 = scmp.eq.s32.totalorder %s24, 1
      %p152 = scmp.ne.s32.totalorder %s147, %s149
      %p153 = scmp.eq.s32.totalorder %s24, 0
      %p154 = por %p152, %p153
      %p155 = scmp.ne.s32.totalorder %s147, %s149
      %p156 = scmp.eq.s32.totalorder %s29, 1
      %p157 = por %p155, %p156
      %p158 = scmp.ne.s32.totalorder %s149, %s150
      %p159 = scmp.eq.s32.totalorder %s29, 0
      %p160 = por %p158, %p159
      %p161 = scmp.ne.s32.totalorder %s149, %s150
      %p162 = scmp.eq.s32.totalorder %s30, 1
      %p163 = por %p161, %p162
      %p165 = scmp.ne.s32.totalorder %s150, %s164
      %p166 = scmp.eq.s32.totalorder %s30, 0
      %p167 = por %p165, %p166
      %s169 = sadd.s32 %s168, 1
      %p172 = scmp.eq.s32.totalorder %s24, 1
      %p173 = scmp.ne.s32.totalorder %s168, %s170
      %p174 = scmp.eq.s32.totalorder %s24, 0
      %p175 = por %p173, %p174
      %p176 = scmp.ne.s32.totalorder %s168, %s170
      %p177 = scmp.eq.s32.totalorder %s29, 1
      %p178 = por %p176, %p177
      %p179 = scmp.ne.s32.totalorder %s170, %s171
      %p180 = scmp.eq.s32.totalorder %s29, 0
      %p181 = por %p179, %p180
      %p182 = scmp.ne.s32.totalorder %s170, %s171
      %p183 = scmp.eq.s32.totalorder %s30, 1
      %p184 = por %p182, %p183
      %p186 = scmp.ne.s32.totalorder %s171, %s185
      %p187 = scmp.eq.s32.totalorder %s30, 0
      %p188 = por %p186, %p187
      %s190 = sadd.s32 %s189, 1
      %p193 = scmp.eq.s32.totalorder %s24, 1
      %p194 = scmp.ne.s32.totalorder %s189, %s191
      %p195 = scmp.eq.s32.totalorder %s24, 0
      %p196 = por %p194, %p195
      %p197 = scmp.ne.s32.totalorder %s189, %s191
      %p198 = scmp.eq.s32.totalorder %s29, 1
      %p199 = por %p197, %p198
      %p200 = scmp.ne.s32.totalorder %s191, %s192
      %p201 = scmp.eq.s32.totalorder %s29, 0
      %p202 = por %p200, %p201
      %p203 = scmp.ne.s32.totalorder %s191, %s192
      %p204 = scmp.eq.s32.totalorder %s30, 1
      %p205 = por %p203, %p204
      %p207 = scmp.ne.s32.totalorder %s192, %s206
      %p208 = scmp.eq.s32.totalorder %s30, 0
      %p209 = por %p207, %p208
      %s211 = sadd.s32 %s210, 1
      %p214 = scmp.eq.s32.totalorder %s24, 1
      %p215 = scmp.ne.s32.totalorder %s210, %s212
      %p216 = scmp.eq.s32.totalorder %s24, 0
      %p217 = por %p215, %p216
      %p218 = scmp.ne.s32.totalorder %s210, %s212
      %p219 = scmp.eq.s32.totalorder %s29, 1
      %p220 = por %p218, %p219
      %p221 = scmp.ne.s32.totalorder %s212, %s213
      %p222 = scmp.eq.s32.totalorder %s29, 0
      %p223 = por %p221, %p222
      %p224 = scmp.ne.s32.totalorder %s212, %s213
      %p225 = scmp.eq.s32.totalorder %s30, 1
      %p226 = por %p224, %p225
      %p228 = scmp.ne.s32.totalorder %s213, %s227
      %p229 = scmp.eq.s32.totalorder %s30, 0
      %p230 = por %p228, %p229
      %s232 = sadd.s32 %s231, 1
      %p235 = scmp.eq.s32.totalorder %s24, 1
      %p236 = scmp.ne.s32.totalorder %s231, %s233
      %p237 = scmp.eq.s32.totalorder %s24, 0
      %p238 = por %p236, %p237
      %p239 = scmp.ne.s32.totalorder %s231, %s233
      %p240 = scmp.eq.s32.totalorder %s29, 1
      %p241 = por %p239, %p240
      %p242 = scmp.ne.s32.totalorder %s233, %s234
      %p243 = scmp.eq.s32.totalorder %s29, 0
      %p244 = por %p242, %p243
      %p245 = scmp.ne.s32.totalorder %s233, %s234
      %p246 = scmp.eq.s32.totalorder %s30, 1
      %p247 = por %p245, %p246
      %p249 = scmp.ne.s32.totalorder %s234, %s248
      %p250 = scmp.eq.s32.totalorder %s30, 0
      %p251 = por %p249, %p250
      %s253 = sadd.s32 %s252, 1
      %p256 = scmp.eq.s32.totalorder %s24, 1
      %p257 = scmp.ne.s32.totalorder %s252, %s254
      %p258 = scmp.eq.s32.totalorder %s24, 0
      %p259 = por %p257, %p258
      %p260 = scmp.ne.s32.totalorder %s252, %s254
      %p261 = scmp.eq.s32.totalorder %s29, 1
      %p262 = por %p260, %p261
      %p263 = scmp.ne.s32.totalorder %s254, %s255
      %p264 = scmp.eq.s32.totalorder %s29, 0
      %p265 = por %p263, %p264
      %p266 = scmp.ne.s32.totalorder %s254, %s255
      %p267 = scmp.eq.s32.totalorder %s30, 1
      %p268 = por %p266, %p267
      %p270 = scmp.ne.s32.totalorder %s255, %s269
      %p271 = scmp.eq.s32.totalorder %s30, 0
      %p272 = por %p270, %p271
      %s274 = sadd.s32 %s273, 1
      %p277 = scmp.eq.s32.totalorder %s24, 1
      %p278 = scmp.ne.s32.totalorder %s273, %s275
      %p279 = scmp.eq.s32.totalorder %s24, 0
      %p280 = por %p278, %p279
      %p281 = scmp.ne.s32.totalorder %s273, %s275
      %p282 = scmp.eq.s32.totalorder %s29, 1
      %p283 = por %p281, %p282
      %p284 = scmp.ne.s32.totalorder %s275, %s276
      %p285 = scmp.eq.s32.totalorder %s29, 0
      %p286 = por %p284, %p285
      %p287 = scmp.ne.s32.totalorder %s275, %s276
      %p288 = scmp.eq.s32.totalorder %s30, 1
      %p289 = por %p287, %p288
      %p291 = scmp.ne.s32.totalorder %s276, %s290
      %p292 = scmp.eq.s32.totalorder %s30, 0
      %p293 = por %p291, %p292
      %s295 = sadd.s32 %s294, 1
      %p298 = scmp.eq.s32.totalorder %s24, 1
      %p299 = scmp.ne.s32.totalorder %s294, %s296
      %p300 = scmp.eq.s32.totalorder %s24, 0
      %p301 = por %p299, %p300
      %p302 = scmp.ne.s32.totalorder %s294, %s296
      %p303 = scmp.eq.s32.totalorder %s29, 1
      %p304 = por %p302, %p303
      %p305 = scmp.ne.s32.totalorder %s296, %s297
      %p306 = scmp.eq.s32.totalorder %s29, 0
      %p307 = por %p305, %p306
      %p308 = scmp.ne.s32.totalorder %s296, %s297
      %p309 = scmp.eq.s32.totalorder %s30, 1
      %p310 = por %p308, %p309
      %p312 = scmp.ne.s32.totalorder %s297, %s311
      %p313 = scmp.eq.s32.totalorder %s30, 0
      %p314 = por %p312, %p313
      %s316 = sadd.s32 %s315, 1
      %p319 = scmp.eq.s32.totalorder %s24, 1
      %p320 = scmp.ne.s32.totalorder %s315, %s317
      %p321 = scmp.eq.s32.totalorder %s24, 0
      %p322 = por %p320, %p321
      %p323 = scmp.ne.s32.totalorder %s315, %s317
      %p324 = scmp.eq.s32.totalorder %s29, 1
      %p325 = por %p323, %p324
      %p326 = scmp.ne.s32.totalorder %s317, %s318
      %p327 = scmp.eq.s32.totalorder %s29, 0
      %p328 = por %p326, %p327
      %p329 = scmp.ne.s32.totalorder %s317, %s318
      %p330 = scmp.eq.s32.totalorder %s30, 1
      %p331 = por %p329, %p330
      %p333 = scmp.ne.s32.totalorder %s318, %s332
      %p334 = scmp.eq.s32.totalorder %s30, 0
      %p335 = por %p333, %p334
      %s337 = sadd.s32 %s336, 1
      %p340 = scmp.eq.s32.totalorder %s24, 1
      %p341 = scmp.ne.s32.totalorder %s336, %s338
      %p342 = scmp.eq.s32.totalorder %s24, 0
      %p343 = por %p341, %p342
      %p344 = scmp.ne.s32.totalorder %s336, %s338
      %p345 = scmp.eq.s32.totalorder %s29, 1
      %p346 = por %p344, %p345
      %p347 = scmp.ne.s32.totalorder %s338, %s339
      %p348 = scmp.eq.s32.totalorder %s29, 0
      %p349 = por %p347, %p348
      %p350 = scmp.ne.s32.totalorder %s338, %s339
      %p351 = scmp.eq.s32.totalorder %s30, 1
      %p352 = por %p350, %p351
      %p354 = scmp.ne.s32.totalorder %s339, %s353
      %p355 = scmp.eq.s32.totalorder %s30, 0
      %p356 = por %p354, %p355
      %s357 = ssub.s32 %s24, %s31
      %p358 = scmp.eq.s32.totalorder %s357, 0
      %s360 = sadd.s32 %s359, 1
      %s361 = scalar_select %p358, %s359, %s360
      %p364 = pneg %p358
      %p365 = scmp.eq.s32.totalorder %s24, 1
      %p366 = por %p364, %p365
      %p367 = scmp.ne.s32.totalorder %s359, %s362
      %p368 = scmp.eq.s32.totalorder %s24, 0
      %p369 = por %p367, %p368
      %p370 = scmp.ne.s32.totalorder %s359, %s362
      %p371 = scmp.eq.s32.totalorder %s29, 1
      %p372 = por %p370, %p371
      %p373 = scmp.ne.s32.totalorder %s362, %s363
      %p374 = scmp.eq.s32.totalorder %s29, 0
      %p375 = por %p373, %p374
      %p376 = scmp.ne.s32.totalorder %s362, %s363
      %p377 = scmp.eq.s32.totalorder %s30, 1
      %p378 = por %p376, %p377
      %p380 = scmp.ne.s32.totalorder %s363, %s379
      %p381 = scmp.eq.s32.totalorder %s30, 0
      %p382 = por %p380, %p381
      %p383 = scmp.le.s32.totalorder 1, %s24
      %p384 = scmp.lt.s32.totalorder %s24, 3
      %p385 = pnand %p383, %p384
      %p386 = pneg %p385
      // Predicated region
      $region9: #{molformer_forward.1} parent=5 // pred_check
        _
      $region10: #{molformer_forward.1} parent=5 // pred_check_branch
        %388 = sbr.rel (%p385) target = $region12
      $region11: #{molformer_forward.1} parent=5 // pred_region
        %s389 = ssub.s32 %s24, 1
        // Predicated region
        $region13: #{molformer_forward.1} parent=11 // pred_check
          %p390 = pneg %p97
        $region14: #{molformer_forward.1} parent=11 // pred_check_branch
          %392 = sbr.rel (%p390) target = $region16
        $region15: #{molformer_forward.1} parent=11 // pred_region
          _
        $region16: #{molformer_forward.1} parent=11 // pred_fallthru
          _
        // Predicated region
        $region17: #{molformer_forward.1} parent=11 // pred_check
          %p393 = pneg %p118
        $region18: #{molformer_forward.1} parent=11 // pred_check_branch
          %395 = sbr.rel (%p393) target = $region20
        $region19: #{molformer_forward.1} parent=11 // pred_region
          _
        $region20: #{molformer_forward.1} parent=11 // pred_fallthru
          _
        // Predicated region
        $region21: #{molformer_forward.1} parent=11 // pred_check
          %p396 = pneg %p139
        $region22: #{molformer_forward.1} parent=11 // pred_check_branch
          %398 = sbr.rel (%p396) target = $region24
        $region23: #{molformer_forward.1} parent=11 // pred_region
          _
        $region24: #{molformer_forward.1} parent=11 // pred_fallthru
          _
        // Predicated region
        $region25: #{molformer_forward.1} parent=11 // pred_check
          %p399 = pneg %p160
        $region26: #{molformer_forward.1} parent=11 // pred_check_branch
          %401 = sbr.rel (%p399) target = $region28
        $region27: #{molformer_forward.1} parent=11 // pred_region
          _
        $region28: #{molformer_forward.1} parent=11 // pred_fallthru
          _
        // Predicated region
        $region29: #{molformer_forward.1} parent=11 // pred_check
          %p402 = pneg %p181
        $region30: #{molformer_forward.1} parent=11 // pred_check_branch
          %404 = sbr.rel (%p402) target = $region32
        $region31: #{molformer_forward.1} parent=11 // pred_region
          _
        $region32: #{molformer_forward.1} parent=11 // pred_fallthru
          _
        // Predicated region
        $region33: #{molformer_forward.1} parent=11 // pred_check
          %p405 = pneg %p202
        $region34: #{molformer_forward.1} parent=11 // pred_check_branch
          %407 = sbr.rel (%p405) target = $region36
        $region35: #{molformer_forward.1} parent=11 // pred_region
          _
        $region36: #{molformer_forward.1} parent=11 // pred_fallthru
          _
        // Predicated region
        $region37: #{molformer_forward.1} parent=11 // pred_check
          %p408 = pneg %p223
        $region38: #{molformer_forward.1} parent=11 // pred_check_branch
          %410 = sbr.rel (%p408) target = $region40
        $region39: #{molformer_forward.1} parent=11 // pred_region
          _
        $region40: #{molformer_forward.1} parent=11 // pred_fallthru
          _
        // Predicated region
        $region41: #{molformer_forward.1} parent=11 // pred_check
          %p411 = pneg %p244
        $region42: #{molformer_forward.1} parent=11 // pred_check_branch
          %413 = sbr.rel (%p411) target = $region44
        $region43: #{molformer_forward.1} parent=11 // pred_region
          _
        $region44: #{molformer_forward.1} parent=11 // pred_fallthru
          _
        // Predicated region
        $region45: #{molformer_forward.1} parent=11 // pred_check
          %p414 = pneg %p265
        $region46: #{molformer_forward.1} parent=11 // pred_check_branch
          %416 = sbr.rel (%p414) target = $region48
        $region47: #{molformer_forward.1} parent=11 // pred_region
          _
        $region48: #{molformer_forward.1} parent=11 // pred_fallthru
          _
        // Predicated region
        $region49: #{molformer_forward.1} parent=11 // pred_check
          %p417 = pneg %p286
        $region50: #{molformer_forward.1} parent=11 // pred_check_branch
          %419 = sbr.rel (%p417) target = $region52
        $region51: #{molformer_forward.1} parent=11 // pred_region
          _
        $region52: #{molformer_forward.1} parent=11 // pred_fallthru
          _
        // Predicated region
        $region53: #{molformer_forward.1} parent=11 // pred_check
          %p420 = pneg %p307
        $region54: #{molformer_forward.1} parent=11 // pred_check_branch
          %422 = sbr.rel (%p420) target = $region56
        $region55: #{molformer_forward.1} parent=11 // pred_region
          _
        $region56: #{molformer_forward.1} parent=11 // pred_fallthru
          _
        // Predicated region
        $region57: #{molformer_forward.1} parent=11 // pred_check
          %p423 = pneg %p328
        $region58: #{molformer_forward.1} parent=11 // pred_check_branch
          %425 = sbr.rel (%p423) target = $region60
        $region59: #{molformer_forward.1} parent=11 // pred_region
          _
        $region60: #{molformer_forward.1} parent=11 // pred_fallthru
          _
        // Predicated region
        $region61: #{molformer_forward.1} parent=11 // pred_check
          %p426 = pneg %p349
        $region62: #{molformer_forward.1} parent=11 // pred_check_branch
          %428 = sbr.rel (%p426) target = $region64
        $region63: #{molformer_forward.1} parent=11 // pred_region
          _
        $region64: #{molformer_forward.1} parent=11 // pred_fallthru
          _
      $region12: #{molformer_forward.1} parent=5 // pred_fallthru
        _
      %p429 = scmp.lt.s32.totalorder %s24, 2
      // Predicated region
      $region65: #{molformer_forward.1} parent=5 // pred_check
        %p430 = pneg %p429
      $region66: #{molformer_forward.1} parent=5 // pred_check_branch
        %432 = sbr.rel (%p430) target = $region68
      $region67: #{molformer_forward.1} parent=5 // pred_region
        // Predicated region
        $region69: #{molformer_forward.1} parent=67 // pred_check
          %p433 = pneg %p44
        $region70: #{molformer_forward.1} parent=67 // pred_check_branch
          %435 = sbr.rel (%p433) target = $region72
        $region71: #{molformer_forward.1} parent=67 // pred_region
          %p436 = scmp.lt.s32.totalorder %s24, 1
          %s437 = scalar_select %p436, %s24, 1
          %s438 = smul.addr %s437, 8
          %s439 = scalar_lea.vmem %s0, %s438
        $region72: #{molformer_forward.1} parent=67 // pred_fallthru
          _
        // Predicated region
        $region73: #{molformer_forward.1} parent=67 // pred_check
          %p440 = pneg %p70
        $region74: #{molformer_forward.1} parent=67 // pred_check_branch
          %442 = sbr.rel (%p440) target = $region76
        $region75: #{molformer_forward.1} parent=67 // pred_region
          %p443 = scmp.lt.s32.totalorder %s24, 1
          %s444 = scalar_select %p443, %s24, 1
          %s445 = smul.addr %s444, 8
          %s446 = scalar_lea.vmem %s1, %s445
        $region76: #{molformer_forward.1} parent=67 // pred_fallthru
          _
      $region68: #{molformer_forward.1} parent=5 // pred_fallthru
        _
      %p447 = scmp.le.s32.totalorder 1, %s24
      %p448 = scmp.lt.s32.totalorder %s24, 3
      %p449 = pnand %p447, %p448
      %p450 = pneg %p449
      // Predicated region
      $region77: #{molformer_forward.1} parent=5 // pred_check
        _
      $region78: #{molformer_forward.1} parent=5 // pred_check_branch
        %452 = sbr.rel (%p449) target = $region80
      $region79: #{molformer_forward.1} parent=5 // pred_region
        %s453 = ssub.s32 %s24, 1
        %p454 = scmp.lt.s32.totalorder %s29, 1
        %s455 = scalar_select %p454, %s29, 1
        %s456 = smul.addr %s455, 8
        %s457 = scalar_lea.vmem %s0, %s456
        %p458 = pneg %p50
        %p459 = pneg %p47
        %p460 = scmp.lt.s32.totalorder %s29, 1
        %s461 = scalar_select %p460, %s29, 1
        %s462 = smul.addr %s461, 8
        %s463 = scalar_lea.vmem %s1, %s462
        %p464 = pneg %p76
        %p465 = pneg %p73
        %p466 = pneg %p97
        %p467 = pneg %p94
        %p468 = pneg %p118
        %p469 = pneg %p115
        %p470 = pneg %p139
        %p471 = pneg %p136
        %p472 = pneg %p160
        %p473 = pneg %p157
        %p474 = pneg %p181
        %p475 = pneg %p178
        %p476 = pneg %p202
        %p477 = pneg %p199
        %p478 = pneg %p223
        %p479 = pneg %p220
        %p480 = pneg %p244
        %p481 = pneg %p241
        %p482 = pneg %p265
        %p483 = pneg %p262
        %p484 = pneg %p286
        %p485 = pneg %p283
        %p486 = pneg %p307
        %p487 = pneg %p304
        %p488 = pneg %p328
        %p489 = pneg %p325
        %p490 = pneg %p349
        %p491 = pneg %p346
        %p492 = pneg %p375
        %p493 = pneg %p372
        %s494 = sand.u32 %s362, 1
        %s495 = scalar_lea.sflag [#allocation3], %s494
        %s496 = sand.u32 %s362, 1
        %s497 = smul.addr %s496, 8
        %s498 = scalar_lea.vmem [#allocation2], %s497
        %p499 = scmp.lt.s32.totalorder %s29, 1
        %s500 = scalar_select %p499, %s29, 1
        %s501 = smul.addr %s500, 8
        %s502 = scalar_lea.vmem %s0, %s501
        %p503 = scmp.lt.s32.totalorder %s29, 1
        %s504 = scalar_select %p503, %s29, 1
        %s505 = smul.addr %s504, 8
        %s506 = scalar_lea.vmem %s1, %s505
        %v507 = vld [vmem:[%s502] sm:$0xff]
        %v508 = vld [vmem:[%s506] sm:$0xff]
        %v509 = vld [vmem:[%s2] sm:$0xff]
        %v510 = vld [vmem:[%s3] sm:$0xff]
        %v511 = vld [vmem:[%s4] sm:$0xff]
        %v512 = vld [vmem:[%s4 + $0x8] sm:$0xff]
        %v513 = vld [vmem:[%s4 + $0x10] sm:$0xff]
        %v514 = vld [vmem:[%s4 + $0x18] sm:$0xff]
        %v515 = vld [vmem:[%s4 + $0x20] sm:$0xff]
        %v516 = vld [vmem:[%s4 + $0x28] sm:$0xff]
        %v517 = vld [vmem:[%s4 + $0x30] sm:$0xff]
        %v518 = vld [vmem:[%s4 + $0x38] sm:$0xff]
        %v519 = vld [vmem:[%s5] sm:$0xff]
        %v520 = vld [vmem:[%s5 + $0x8] sm:$0xff]
        %v521 = vld [vmem:[%s5 + $0x10] sm:$0xff]
        %v522 = vld [vmem:[%s5 + $0x18] sm:$0xff]
        %v523 = vld [vmem:[%s5 + $0x20] sm:$0xff]
        %v524 = vld [vmem:[%s5 + $0x28] sm:$0xff]
        %v525 = vld [vmem:[%s5 + $0x30] sm:$0xff]
        %v526 = vld [vmem:[%s5 + $0x38] sm:$0xff]
        %v527 = vld [vmem:[%s6] sm:$0xff]
        %v528 = vld [vmem:[%s6 + $0x8] sm:$0xff]
        %v529 = vld [vmem:[%s6 + $0x10] sm:$0xff]
        %v530 = vld [vmem:[%s6 + $0x18] sm:$0xff]
        %v531 = vld [vmem:[%s7] sm:$0x1]
        %v533 = vperm.slane %v531, 0
        %vm535 = vcmask 261120
        %v537 = vsel %vm535, %v507, 0
        %539 = vmatpush.msra.mxu0 0.0
        %540 = vmatpush.msra.mxu0 0.0
        %541 = vmatpush.msra.mxu0 0.0
        %542 = vmatpush.msra.mxu0 0.0
        %543 = vmatpush.msra.mxu0 0.0
        %544 = vmatpush.msra.mxu0 0.0
        %545 = vmatpush.msra.mxu0 0.0
        %546 = vmatpush.msra.mxu0 0.0
        %547 = vmatpush.msra.mxu0 0.0
        %548 = vmatpush.msra.mxu0 0.0
        %549 = vmatpush.msra.mxu0 0.0
        %550 = vmatpush.msra.mxu0 0.0
        %551 = vmatpush.msra.mxu0 %v530
        %552 = vmatpush.msra.mxu0 %v529
        %553 = vmatpush.msra.mxu0 %v528
        %554 = vmatpush.msra.mxu0 %v527
        %555 = vmatmul.f32.gmra.mxu0 %v537
        %v556 = vpop.f32.mrf.mxu0
        %v557 = vadd.f32 %v533, %v556
        %558 = vdwg.mxu0
        %v559 = vmul.f32 %v557, %v509
        %vm560 = vcmask 523264
        %v562 = vsel %vm560, %v557, 0
        %564 = vmatpush.msra.mxu0 0.0
        %565 = vmatpush.msra.mxu0 0.0
        %566 = vmatpush.msra.mxu0 0.0
        %567 = vmatpush.msra.mxu0 0.0
        %568 = vmatpush.msra.mxu0 0.0
        %569 = vmatpush.msra.mxu0 0.0
        %570 = vmatpush.msra.mxu0 0.0
        %571 = vmatpush.msra.mxu0 0.0
        %572 = vmatpush.msra.mxu0 %v518
        %573 = vmatpush.msra.mxu0 %v517
        %574 = vmatpush.msra.mxu0 %v516
        %575 = vmatpush.msra.mxu0 %v515
        %576 = vmatpush.msra.mxu0 %v514
        %577 = vmatpush.msra.mxu0 %v513
        %578 = vmatpush.msra.mxu0 %v512
        %579 = vmatpush.msra.mxu0 %v511
        %580 = vmatmul.f32.gmra.mxu0 %v562
        %v581 = vpop.f32.mrf.mxu0
        %v582 = vadd.f32 0.0, %v581
        %583 = vdwg.mxu0
        %v584 = vmul.f32 %v582, %v510
        %v585 = vadd.f32 %v559, %v584
        %v586 = vld [vmem:[%s8] sm:$0xff]
        %v587 = vld [vmem:[%s8 + $0x8] sm:$0xff]
        %v588 = vld [vmem:[%s8 + $0x10] sm:$0xff]
        %v589 = vld [vmem:[%s8 + $0x18] sm:$0xff]
        %v590 = vld [vmem:[%s8 + $0x20] sm:$0xff]
        %v591 = vld [vmem:[%s8 + $0x28] sm:$0xff]
        %v592 = vld [vmem:[%s8 + $0x30] sm:$0xff]
        %v593 = vld [vmem:[%s8 + $0x38] sm:$0xff]
        %v595 = vsel %vm560, %v585, 0
        %597 = vmatpush.msra.mxu0 0.0
        %598 = vmatpush.msra.mxu0 0.0
        %599 = vmatpush.msra.mxu0 0.0
        %600 = vmatpush.msra.mxu0 0.0
        %601 = vmatpush.msra.mxu0 0.0
        %602 = vmatpush.msra.mxu0 0.0
        %603 = vmatpush.msra.mxu0 0.0
        %604 = vmatpush.msra.mxu0 0.0
        %605 = vmatpush.msra.mxu0 %v593
        %606 = vmatpush.msra.mxu0 %v592
        %607 = vmatpush.msra.mxu0 %v591
        %608 = vmatpush.msra.mxu0 %v590
        %609 = vmatpush.msra.mxu0 %v589
        %610 = vmatpush.msra.mxu0 %v588
        %611 = vmatpush.msra.mxu0 %v587
        %612 = vmatpush.msra.mxu0 %v586
        %613 = vmatmul.f32.gmra.mxu0 %v595
        %v614 = vpop.f32.mrf.mxu0
        %v615 = vadd.f32 0.0, %v614
        %616 = vdwg.mxu0
        %v617 = vmax.f32 %v615, 0.0
        %619 = vset.pattern.permute.xlu0 0
        %620 = vperm.xlu0 %619, %v508
        %v621 = vpop.permute.xlu0 %620
        %v623 = vmul.f32 %v617, %v621
        %625 = vrot.lane.b32.xlu0 %v623, 64
        %v626 = vpop.permute.xlu0 %625
        %628 = vxpose.xlu0.b32.start [1/16] %v626, 128
        %629 = vxpose.xlu0.b32.cont [2/16] 0.0, 128
        %630 = vxpose.xlu0.b32.cont [3/16] 0.0, 128
        %631 = vxpose.xlu0.b32.cont [4/16] 0.0, 128
        %632 = vxpose.xlu0.b32.cont [5/16] 0.0, 128
        %633 = vxpose.xlu0.b32.cont [6/16] 0.0, 128
        %634 = vxpose.xlu0.b32.cont [7/16] 0.0, 128
        %635 = vxpose.xlu0.b32.cont [8/16] 0.0, 128
        %636 = vxpose.xlu0.b32.cont [9/16] 0.0, 128
        %637 = vxpose.xlu0.b32.cont [10/16] 0.0, 128
        %638 = vxpose.xlu0.b32.cont [11/16] 0.0, 128
        %639 = vxpose.xlu0.b32.cont [12/16] 0.0, 128
        %640 = vxpose.xlu0.b32.cont [13/16] 0.0, 128
        %641 = vxpose.xlu0.b32.cont [14/16] 0.0, 128
        %642 = vxpose.xlu0.b32.cont [15/16] 0.0, 128
        %643 = vxpose.xlu0.b32.end [16/16] 0.0, 128
        %v644 = vpop.trf.xlu0
        %v645 = vpop.trf.xlu0
        %v646 = vpop.trf.xlu0
        %v647 = vpop.trf.xlu0
        %v648 = vpop.trf.xlu0
        %v649 = vpop.trf.xlu0
        %v650 = vpop.trf.xlu0
        %v651 = vpop.trf.xlu0
        %v652 = vpop.trf.xlu0
        %v653 = vpop.trf.xlu0
        %v654 = vpop.trf.xlu0
        %v655 = vpop.trf.xlu0
        %v656 = vpop.trf.xlu0
        %v657 = vpop.trf.xlu0
        %v658 = vpop.trf.xlu0
        %v659 = vpop.trf.xlu0
        %660 = vrot.lane.b32.xlu0 %v557, 64
        %v661 = vpop.permute.xlu0 %660
        %vm663 = vcmask 64512
        %v665 = vsel %vm663, %v644, 0
        %v668 = vsel %vm663, %v645, 0
        %v671 = vsel %vm663, %v646, 0
        %v674 = vsel %vm663, %v647, 0
        %v677 = vsel %vm663, %v648, 0
        %v680 = vsel %vm663, %v649, 0
        %v683 = vsel %vm663, %v650, 0
        %v686 = vsel %vm663, %v651, 0
        %688 = vmatpush.msra.mxu0 0.0
        %689 = vmatpush.msra.mxu0 0.0
        %690 = vmatpush.msra.mxu0 0.0
        %691 = vmatpush.msra.mxu0 0.0
        %692 = vmatpush.msra.mxu0 0.0
        %693 = vmatpush.msra.mxu0 0.0
        %694 = vmatpush.msra.mxu0 0.0
        %695 = vmatpush.msra.mxu0 0.0
        %696 = vmatpush.msra.mxu0 0.0
        %697 = vmatpush.msra.mxu0 0.0
        %698 = vmatpush.msra.mxu0 0.0
        %699 = vmatpush.msra.mxu0 0.0
        %700 = vmatpush.msra.mxu0 0.0
        %701 = vmatpush.msra.mxu0 0.0
        %702 = vmatpush.msra.mxu0 0.0
        %703 = vmatpush.msra.mxu0 %v661
        %704 = vmatmul.f32.gmra.mxu0 %v665
        %v705 = vpop.f32.mrf.mxu0
        %v706 = vadd.f32 0.0, %v705
        %707 = vmatmul.f32.gmra.mxu0 %v668
        %v708 = vpop.f32.mrf.mxu0
        %v709 = vadd.f32 0.0, %v708
        %710 = vmatmul.f32.gmra.mxu0 %v671
        %v711 = vpop.f32.mrf.mxu0
        %v712 = vadd.f32 0.0, %v711
        %713 = vmatmul.f32.gmra.mxu0 %v674
        %v714 = vpop.f32.mrf.mxu0
        %v715 = vadd.f32 0.0, %v714
        %716 = vmatmul.f32.gmra.mxu0 %v677
        %v717 = vpop.f32.mrf.mxu0
        %v718 = vadd.f32 0.0, %v717
        %719 = vmatmul.f32.gmra.mxu0 %v680
        %v720 = vpop.f32.mrf.mxu0
        %v721 = vadd.f32 0.0, %v720
        %722 = vmatmul.f32.gmra.mxu0 %v683
        %v723 = vpop.f32.mrf.mxu0
        %v724 = vadd.f32 0.0, %v723
        %725 = vmatmul.f32.gmra.mxu0 %v686
        %v726 = vpop.f32.mrf.mxu0
        %v727 = vadd.f32 0.0, %v726
        %728 = vdwg.mxu0
        %v729 = vmul.f32 %v706, %v519
        %v730 = vmul.f32 %v709, %v520
        %v731 = vmul.f32 %v712, %v521
        %v732 = vmul.f32 %v715, %v522
        %v733 = vmul.f32 %v718, %v523
        %v734 = vmul.f32 %v721, %v524
        %v735 = vmul.f32 %v724, %v525
        %v736 = vmul.f32 %v727, %v526
        %v738 = vsel %vm560, %v617, 0
        %740 = vmatpush.msra.mxu0 0.0
        %741 = vmatpush.msra.mxu0 0.0
        %742 = vmatpush.msra.mxu0 0.0
        %743 = vmatpush.msra.mxu0 0.0
        %744 = vmatpush.msra.mxu0 0.0
        %745 = vmatpush.msra.mxu0 0.0
        %746 = vmatpush.msra.mxu0 0.0
        %747 = vmatpush.msra.mxu0 0.0
        %748 = vmatpush.msra.mxu0 %v736
        %749 = vmatpush.msra.mxu0 %v735
        %750 = vmatpush.msra.mxu0 %v734
        %751 = vmatpush.msra.mxu0 %v733
        %752 = vmatpush.msra.mxu0 %v732
        %753 = vmatpush.msra.mxu0 %v731
        %754 = vmatpush.msra.mxu0 %v730
        %755 = vmatpush.msra.mxu0 %v729
        %756 = vmatmul.f32.gmra.mxu0 %v738
        %v757 = vpop.f32.mrf.mxu0
        %v758 = vadd.f32 0.0, %v757
        %759 = vdwg.mxu0
        %v760 = vadd.f32 %v758, 1e-06
        %v761 = vrcp.pop %v760
        %763 = vrot.lane.b32.xlu0 %v761, 96
        %v764 = vpop.permute.xlu0 %763
        %v766 = vmul.f32 %v758, %v764
        %v767 = vld [vmem:[%s12] sm:$0xff]
        %v768 = vld [vmem:[%s9] sm:$0xff]
        %v769 = vld [vmem:[%s9 + $0x8] sm:$0xff]
        %v770 = vld [vmem:[%s9 + $0x10] sm:$0xff]
        %v771 = vld [vmem:[%s9 + $0x18] sm:$0xff]
        %v772 = vperm.slane %v767, 0
        %v774 = vsel %vm535, %v766, 0
        %776 = vmatpush.msra.mxu0 0.0
        %777 = vmatpush.msra.mxu0 0.0
        %778 = vmatpush.msra.mxu0 0.0
        %779 = vmatpush.msra.mxu0 0.0
        %780 = vmatpush.msra.mxu0 0.0
        %781 = vmatpush.msra.mxu0 0.0
        %782 = vmatpush.msra.mxu0 0.0
        %783 = vmatpush.msra.mxu0 0.0
        %784 = vmatpush.msra.mxu0 0.0
        %785 = vmatpush.msra.mxu0 0.0
        %786 = vmatpush.msra.mxu0 0.0
        %787 = vmatpush.msra.mxu0 0.0
        %788 = vmatpush.msra.mxu0 %v771
        %789 = vmatpush.msra.mxu0 %v770
        %790 = vmatpush.msra.mxu0 %v769
        %791 = vmatpush.msra.mxu0 %v768
        %792 = vmatmul.f32.gmra.mxu0 %v774
        %v793 = vpop.f32.mrf.mxu0
        %v794 = vadd.f32 %v772, %v793
        %795 = vdwg.mxu0
        %v796 = vadd.f32 %v507, %v794
        %v797 = vsel %vm535, %v796, 0.0
        %798 = vadd.xlane.f32.xlu0 %v797
        %v799 = vpop.xlane.xlu0 %798
        %v800 = vrcp.pop 32.0
        %v801 = vmul.f32 32.0, %v800
        %v802 = vsub.f32 1.0, %v801
        %v803 = vmul.f32 %v800, %v802
        %v804 = vadd.f32 %v800, %v803
        %vm805 = vweird.f32 %v800
        %v806 = vsel %vm805, %v800, %v804
        %v807 = vmul.f32 %v799, %v806
        %v808 = vsub.f32 %v796, %v807
        %v809 = vmul.f32 %v808, %v808
        %v810 = vsel %vm535, %v809, 0.0
        %811 = vadd.xlane.f32.xlu0 %v810
        %v812 = vpop.xlane.xlu0 %811
        %v813 = vmul.f32 %v812, %v806
        %v814 = vadd.f32 %v813, 1e-05
        %v815 = vrsqrt.pop %v814
        %v816 = vmul.f32 %v815, %v814
        %v817 = vmul.f32 %v816, %v815
        %v818 = vmul.f32 0.5, %v817
        %v819 = vsub.f32 1.5, %v818
        %v820 = vmul.f32 %v815, %v819
        %vm821 = vweird.f32 %v814
        %vm822 = vweird.f32 %v815
        %vm823 = vmor %vm821, %vm822
        %v824 = vsel %vm823, %v815, %v820
        %v825 = vmul.f32 %v808, %v824
        %v826 = vperm.slane %v767, 1
        %v827 = vmul.f32 %v825, %v826
        %v828 = vperm.slane %v767, 2
        %v829 = vadd.f32 %v827, %v828
        %v830 = vld [vmem:[%s10] sm:$0xff]
        %v831 = vld [vmem:[%s10 + $0x8] sm:$0xff]
        %v832 = vld [vmem:[%s10 + $0x10] sm:$0xff]
        %v833 = vld [vmem:[%s10 + $0x18] sm:$0xff]
        %v834 = vperm.slane %v767, 3
        %v836 = vsel %vm535, %v829, 0
        %838 = vmatpush.msra.mxu0 0.0
        %839 = vmatpush.msra.mxu0 0.0
        %840 = vmatpush.msra.mxu0 0.0
        %841 = vmatpush.msra.mxu0 0.0
        %842 = vmatpush.msra.mxu0 0.0
        %843 = vmatpush.msra.mxu0 0.0
        %844 = vmatpush.msra.mxu0 0.0
        %845 = vmatpush.msra.mxu0 0.0
        %846 = vmatpush.msra.mxu0 0.0
        %847 = vmatpush.msra.mxu0 0.0
        %848 = vmatpush.msra.mxu0 0.0
        %849 = vmatpush.msra.mxu0 0.0
        %850 = vmatpush.msra.mxu0 %v833
        %851 = vmatpush.msra.mxu0 %v832
        %852 = vmatpush.msra.mxu0 %v831
        %853 = vmatpush.msra.mxu0 %v830
        %854 = vmatmul.f32.gmra.mxu0 %v836
        %v855 = vpop.f32.mrf.mxu0
        %v856 = vadd.f32 %v834, %v855
        %857 = vdwg.mxu0
        %v858 = vmul.f32 %v856, 0.5
        %v859 = vmul.f32 %v856, 0.70710677
        %v860 = vmul.f32 %v859, %v859
        %v861 = vmin.f32 16.0, %v860
        %v862 = vmul.f32 %v861, 2.1237322e-06
        %v863 = vadd.f32 %v862, 0.00028619796
        %v864 = vmul.f32 %v861, %v863
        %v865 = vadd.f32 %v864, 0.0036580483
        %v866 = vmul.f32 %v861, %v865
        %v867 = vadd.f32 %v866, 0.05243302
        %v868 = vmul.f32 %v861, %v867
        %v869 = vadd.f32 %v868, 0.18741608
        %v870 = vmul.f32 %v861, %v869
        %v871 = vadd.f32 %v870, 1.1283791
        %v872 = vmul.f32 %v859, %v871
        %v873 = vmul.f32 %v861, 3.8918573e-05
        %v874 = vadd.f32 %v873, 0.001143296
        %v875 = vmul.f32 %v861, %v874
        %v876 = vadd.f32 %v875, 0.014752088
        %v877 = vmul.f32 %v861, %v876
        %v878 = vadd.f32 %v877, 0.112945676
        %v879 = vmul.f32 %v861, %v878
        %v880 = vadd.f32 %v879, 0.4994258
        %v881 = vmul.f32 %v861, %v880
        %v882 = vadd.f32 %v881, 1.0
        %v883 = vrcp.pop %v882
        %v884 = vmul.f32 %v882, %v883
        %v885 = vsub.f32 1.0, %v884
        %v886 = vmul.f32 %v883, %v885
        %v887 = vadd.f32 %v883, %v886
        %vm888 = vweird.f32 %v882
        %vm889 = vweird.f32 %v883
        %vm890 = vmor %vm888, %vm889
        %v891 = vsel %vm890, %v883, %v887
        %v892 = vand.u32 2147483647, %v882
        %vm893 = vcmp.eq.f32.partialorder %v892, 8.507059e+37
        %v894 = vand.u32 %v882, 2147483648
        %v895 = vor.u32 1.1754944e-38, %v894
        %v896 = vsel %vm893, %v895, %v891
        %v897 = vmul.f32 %v872, %v896
        %v898 = vmin.f32 %v897, 1.0
        %v899 = vmax.f32 %v898, -1.0
        %v900 = vadd.f32 %v899, 1.0
        %v901 = vmul.f32 %v858, %v900
        %v902 = vld [vmem:[%s11] sm:$0xff]
        %v903 = vld [vmem:[%s11 + $0x8] sm:$0xff]
        %v904 = vld [vmem:[%s11 + $0x10] sm:$0xff]
        %v905 = vld [vmem:[%s11 + $0x18] sm:$0xff]
        %v906 = vperm.slane %v767, 4
        %v908 = vsel %vm535, %v901, 0
        %910 = vmatpush.msra.mxu0 0.0
        %911 = vmatpush.msra.mxu0 0.0
        %912 = vmatpush.msra.mxu0 0.0
        %913 = vmatpush.msra.mxu0 0.0
        %914 = vmatpush.msra.mxu0 0.0
        %915 = vmatpush.msra.mxu0 0.0
        %916 = vmatpush.msra.mxu0 0.0
        %917 = vmatpush.msra.mxu0 0.0
        %918 = vmatpush.msra.mxu0 0.0
        %919 = vmatpush.msra.mxu0 0.0
        %920 = vmatpush.msra.mxu0 0.0
        %921 = vmatpush.msra.mxu0 0.0
        %922 = vmatpush.msra.mxu0 %v905
        %923 = vmatpush.msra.mxu0 %v904
        %924 = vmatpush.msra.mxu0 %v903
        %925 = vmatpush.msra.mxu0 %v902
        %926 = vmatmul.f32.gmra.mxu0 %v908
        %v927 = vpop.f32.mrf.mxu0
        %v928 = vadd.f32 %v906, %v927
        %929 = vdwg.mxu0
        %v930 = vadd.f32 %v829, %v928
        %v931 = vsel %vm535, %v930, 0.0
        %932 = vadd.xlane.f32.xlu0 %v931
        %v933 = vpop.xlane.xlu0 %932
        %v934 = vmul.f32 %v933, %v806
        %v935 = vsub.f32 %v930, %v934
        %v936 = vmul.f32 %v935, %v935
        %v937 = vsel %vm535, %v936, 0.0
        %938 = vadd.xlane.f32.xlu0 %v937
        %v939 = vpop.xlane.xlu0 %938
        %v940 = vmul.f32 %v939, %v806
        %v941 = vadd.f32 %v940, 1e-05
        %v942 = vrsqrt.pop %v941
        %v943 = vmul.f32 %v942, %v941
        %v944 = vmul.f32 %v943, %v942
        %v945 = vmul.f32 0.5, %v944
        %v946 = vsub.f32 1.5, %v945
        %v947 = vmul.f32 %v942, %v946
        %vm948 = vweird.f32 %v941
        %vm949 = vweird.f32 %v942
        %vm950 = vmor %vm948, %vm949
        %v951 = vsel %vm950, %v942, %v947
        %v952 = vmul.f32 %v935, %v951
        %v953 = vperm.slane %v767, 5
        %v954 = vmul.f32 %v952, %v953
        %v955 = vperm.slane %v767, 6
        %v956 = vadd.f32 %v954, %v955
        %s957 = scalar_lea.vmem %s6, 32
        %v958 = vld [vmem:[%s957] sm:$0xff]
        %v959 = vld [vmem:[%s957 + $0x8] sm:$0xff]
        %v960 = vld [vmem:[%s957 + $0x10] sm:$0xff]
        %v961 = vld [vmem:[%s957 + $0x18] sm:$0xff]
        %s962 = scalar_lea.vmem %s7, 1
        %v963 = vld [vmem:[%s962] sm:$0x1]
        %v965 = vperm.slane %v963, 0
        %v968 = vsel %vm535, %v956, 0
        %970 = vmatpush.msra.mxu0 0.0
        %971 = vmatpush.msra.mxu0 0.0
        %972 = vmatpush.msra.mxu0 0.0
        %973 = vmatpush.msra.mxu0 0.0
        %974 = vmatpush.msra.mxu0 0.0
        %975 = vmatpush.msra.mxu0 0.0
        %976 = vmatpush.msra.mxu0 0.0
        %977 = vmatpush.msra.mxu0 0.0
        %978 = vmatpush.msra.mxu0 0.0
        %979 = vmatpush.msra.mxu0 0.0
        %980 = vmatpush.msra.mxu0 0.0
        %981 = vmatpush.msra.mxu0 0.0
        %982 = vmatpush.msra.mxu0 %v961
        %983 = vmatpush.msra.mxu0 %v960
        %984 = vmatpush.msra.mxu0 %v959
        %985 = vmatpush.msra.mxu0 %v958
        %986 = vmatmul.f32.gmra.mxu0 %v968
        %v987 = vpop.f32.mrf.mxu0
        %v988 = vadd.f32 %v965, %v987
        %989 = vdwg.mxu0
        %v990 = vmul.f32 %v988, %v509
        %v992 = vsel %vm560, %v988, 0
        %994 = vmatpush.msra.mxu0 0.0
        %995 = vmatpush.msra.mxu0 0.0
        %996 = vmatpush.msra.mxu0 0.0
        %997 = vmatpush.msra.mxu0 0.0
        %998 = vmatpush.msra.mxu0 0.0
        %999 = vmatpush.msra.mxu0 0.0
        %1000 = vmatpush.msra.mxu0 0.0
        %1001 = vmatpush.msra.mxu0 0.0
        %1002 = vmatpush.msra.mxu0 %v518
        %1003 = vmatpush.msra.mxu0 %v517
        %1004 = vmatpush.msra.mxu0 %v516
        %1005 = vmatpush.msra.mxu0 %v515
        %1006 = vmatpush.msra.mxu0 %v514
        %1007 = vmatpush.msra.mxu0 %v513
        %1008 = vmatpush.msra.mxu0 %v512
        %1009 = vmatpush.msra.mxu0 %v511
        %1010 = vmatmul.f32.gmra.mxu0 %v992
        %v1011 = vpop.f32.mrf.mxu0
        %v1012 = vadd.f32 0.0, %v1011
        %1013 = vdwg.mxu0
        %v1014 = vmul.f32 %v1012, %v510
        %v1015 = vadd.f32 %v990, %v1014
        %s1016 = scalar_lea.vmem %s8, 64
        %v1017 = vld [vmem:[%s1016] sm:$0xff]
        %v1018 = vld [vmem:[%s1016 + $0x8] sm:$0xff]
        %v1019 = vld [vmem:[%s1016 + $0x10] sm:$0xff]
        %v1020 = vld [vmem:[%s1016 + $0x18] sm:$0xff]
        %v1021 = vld [vmem:[%s1016 + $0x20] sm:$0xff]
        %v1022 = vld [vmem:[%s1016 + $0x28] sm:$0xff]
        %v1023 = vld [vmem:[%s1016 + $0x30] sm:$0xff]
        %v1024 = vld [vmem:[%s1016 + $0x38] sm:$0xff]
        %v1026 = vsel %vm560, %v1015, 0
        %1028 = vmatpush.msra.mxu0 0.0
        %1029 = vmatpush.msra.mxu0 0.0
        %1030 = vmatpush.msra.mxu0 0.0
        %1031 = vmatpush.msra.mxu0 0.0
        %1032 = vmatpush.msra.mxu0 0.0
        %1033 = vmatpush.msra.mxu0 0.0
        %1034 = vmatpush.msra.mxu0 0.0
        %1035 = vmatpush.msra.mxu0 0.0
        %1036 = vmatpush.msra.mxu0 %v1024
        %1037 = vmatpush.msra.mxu0 %v1023
        %1038 = vmatpush.msra.mxu0 %v1022
        %1039 = vmatpush.msra.mxu0 %v1021
        %1040 = vmatpush.msra.mxu0 %v1020
        %1041 = vmatpush.msra.mxu0 %v1019
        %1042 = vmatpush.msra.mxu0 %v1018
        %1043 = vmatpush.msra.mxu0 %v1017
        %1044 = vmatmul.f32.gmra.mxu0 %v1026
        %v1045 = vpop.f32.mrf.mxu0
        %v1046 = vadd.f32 0.0, %v1045
        %1047 = vdwg.mxu0
        %v1048 = vmax.f32 %v1046, 0.0
        %v1049 = vmul.f32 %v1048, %v621
        %1051 = vrot.lane.b32.xlu0 %v1049, 64
        %v1052 = vpop.permute.xlu0 %1051
        %1054 = vxpose.xlu0.b32.start [1/16] %v1052, 128
        %1055 = vxpose.xlu0.b32.cont [2/16] 0.0, 128
        %1056 = vxpose.xlu0.b32.cont [3/16] 0.0, 128
        %1057 = vxpose.xlu0.b32.cont [4/16] 0.0, 128
        %1058 = vxpose.xlu0.b32.cont [5/16] 0.0, 128
        %1059 = vxpose.xlu0.b32.cont [6/16] 0.0, 128
        %1060 = vxpose.xlu0.b32.cont [7/16] 0.0, 128
        %1061 = vxpose.xlu0.b32.cont [8/16] 0.0, 128
        %1062 = vxpose.xlu0.b32.cont [9/16] 0.0, 128
        %1063 = vxpose.xlu0.b32.cont [10/16] 0.0, 128
        %1064 = vxpose.xlu0.b32.cont [11/16] 0.0, 128
        %1065 = vxpose.xlu0.b32.cont [12/16] 0.0, 128
        %1066 = vxpose.xlu0.b32.cont [13/16] 0.0, 128
        %1067 = vxpose.xlu0.b32.cont [14/16] 0.0, 128
        %1068 = vxpose.xlu0.b32.cont [15/16] 0.0, 128
        %1069 = vxpose.xlu0.b32.end [16/16] 0.0, 128
        %v1070 = vpop.trf.xlu0
        %v1071 = vpop.trf.xlu0
        %v1072 = vpop.trf.xlu0
        %v1073 = vpop.trf.xlu0
        %v1074 = vpop.trf.xlu0
        %v1075 = vpop.trf.xlu0
        %v1076 = vpop.trf.xlu0
        %v1077 = vpop.trf.xlu0
        %v1078 = vpop.trf.xlu0
        %v1079 = vpop.trf.xlu0
        %v1080 = vpop.trf.xlu0
        %v1081 = vpop.trf.xlu0
        %v1082 = vpop.trf.xlu0
        %v1083 = vpop.trf.xlu0
        %v1084 = vpop.trf.xlu0
        %v1085 = vpop.trf.xlu0
        %1086 = vrot.lane.b32.xlu0 %v988, 64
        %v1087 = vpop.permute.xlu0 %1086
        %v1090 = vsel %vm663, %v1070, 0
        %v1093 = vsel %vm663, %v1071, 0
        %v1096 = vsel %vm663, %v1072, 0
        %v1099 = vsel %vm663, %v1073, 0
        %v1102 = vsel %vm663, %v1074, 0
        %v1105 = vsel %vm663, %v1075, 0
        %v1108 = vsel %vm663, %v1076, 0
        %v1111 = vsel %vm663, %v1077, 0
        %1113 = vmatpush.msra.mxu0 0.0
        %1114 = vmatpush.msra.mxu0 0.0
        %1115 = vmatpush.msra.mxu0 0.0
        %1116 = vmatpush.msra.mxu0 0.0
        %1117 = vmatpush.msra.mxu0 0.0
        %1118 = vmatpush.msra.mxu0 0.0
        %1119 = vmatpush.msra.mxu0 0.0
        %1120 = vmatpush.msra.mxu0 0.0
        %1121 = vmatpush.msra.mxu0 0.0
        %1122 = vmatpush.msra.mxu0 0.0
        %1123 = vmatpush.msra.mxu0 0.0
        %1124 = vmatpush.msra.mxu0 0.0
        %1125 = vmatpush.msra.mxu0 0.0
        %1126 = vmatpush.msra.mxu0 0.0
        %1127 = vmatpush.msra.mxu0 0.0
        %1128 = vmatpush.msra.mxu0 %v1087
        %1129 = vmatmul.f32.gmra.mxu0 %v1090
        %v1130 = vpop.f32.mrf.mxu0
        %v1131 = vadd.f32 0.0, %v1130
        %1132 = vmatmul.f32.gmra.mxu0 %v1093
        %v1133 = vpop.f32.mrf.mxu0
        %v1134 = vadd.f32 0.0, %v1133
        %1135 = vmatmul.f32.gmra.mxu0 %v1096
        %v1136 = vpop.f32.mrf.mxu0
        %v1137 = vadd.f32 0.0, %v1136
        %1138 = vmatmul.f32.gmra.mxu0 %v1099
        %v1139 = vpop.f32.mrf.mxu0
        %v1140 = vadd.f32 0.0, %v1139
        %1141 = vmatmul.f32.gmra.mxu0 %v1102
        %v1142 = vpop.f32.mrf.mxu0
        %v1143 = vadd.f32 0.0, %v1142
        %1144 = vmatmul.f32.gmra.mxu0 %v1105
        %v1145 = vpop.f32.mrf.mxu0
        %v1146 = vadd.f32 0.0, %v1145
        %1147 = vmatmul.f32.gmra.mxu0 %v1108
        %v1148 = vpop.f32.mrf.mxu0
        %v1149 = vadd.f32 0.0, %v1148
        %1150 = vmatmul.f32.gmra.mxu0 %v1111
        %v1151 = vpop.f32.mrf.mxu0
        %v1152 = vadd.f32 0.0, %v1151
        %1153 = vdwg.mxu0
        %v1154 = vmul.f32 %v1131, %v519
        %v1155 = vmul.f32 %v1134, %v520
        %v1156 = vmul.f32 %v1137, %v521
        %v1157 = vmul.f32 %v1140, %v522
        %v1158 = vmul.f32 %v1143, %v523
        %v1159 = vmul.f32 %v1146, %v524
        %v1160 = vmul.f32 %v1149, %v525
        %v1161 = vmul.f32 %v1152, %v526
        %v1163 = vsel %vm560, %v1048, 0
        %1165 = vmatpush.msra.mxu0 0.0
        %1166 = vmatpush.msra.mxu0 0.0
        %1167 = vmatpush.msra.mxu0 0.0
        %1168 = vmatpush.msra.mxu0 0.0
        %1169 = vmatpush.msra.mxu0 0.0
        %1170 = vmatpush.msra.mxu0 0.0
        %1171 = vmatpush.msra.mxu0 0.0
        %1172 = vmatpush.msra.mxu0 0.0
        %1173 = vmatpush.msra.mxu0 %v1161
        %1174 = vmatpush.msra.mxu0 %v1160
        %1175 = vmatpush.msra.mxu0 %v1159
        %1176 = vmatpush.msra.mxu0 %v1158
        %1177 = vmatpush.msra.mxu0 %v1157
        %1178 = vmatpush.msra.mxu0 %v1156
        %1179 = vmatpush.msra.mxu0 %v1155
        %1180 = vmatpush.msra.mxu0 %v1154
        %1181 = vmatmul.f32.gmra.mxu0 %v1163
        %v1182 = vpop.f32.mrf.mxu0
        %v1183 = vadd.f32 0.0, %v1182
        %1184 = vdwg.mxu0
        %v1185 = vadd.f32 %v1183, 1e-06
        %v1186 = vrcp.pop %v1185
        %1188 = vrot.lane.b32.xlu0 %v1186, 96
        %v1189 = vpop.permute.xlu0 %1188
        %v1191 = vmul.f32 %v1183, %v1189
        %s1192 = scalar_lea.vmem %s12, 8
        %v1193 = vld [vmem:[%s1192] sm:$0xff]
        %s1194 = scalar_lea.vmem %s9, 32
        %v1195 = vld [vmem:[%s1194] sm:$0xff]
        %v1196 = vld [vmem:[%s1194 + $0x8] sm:$0xff]
        %v1197 = vld [vmem:[%s1194 + $0x10] sm:$0xff]
        %v1198 = vld [vmem:[%s1194 + $0x18] sm:$0xff]
        %v1199 = vperm.slane %v1193, 0
        %v1201 = vsel %vm535, %v1191, 0
        %1203 = vmatpush.msra.mxu0 0.0
        %1204 = vmatpush.msra.mxu0 0.0
        %1205 = vmatpush.msra.mxu0 0.0
        %1206 = vmatpush.msra.mxu0 0.0
        %1207 = vmatpush.msra.mxu0 0.0
        %1208 = vmatpush.msra.mxu0 0.0
        %1209 = vmatpush.msra.mxu0 0.0
        %1210 = vmatpush.msra.mxu0 0.0
        %1211 = vmatpush.msra.mxu0 0.0
        %1212 = vmatpush.msra.mxu0 0.0
        %1213 = vmatpush.msra.mxu0 0.0
        %1214 = vmatpush.msra.mxu0 0.0
        %1215 = vmatpush.msra.mxu0 %v1198
        %1216 = vmatpush.msra.mxu0 %v1197
        %1217 = vmatpush.msra.mxu0 %v1196
        %1218 = vmatpush.msra.mxu0 %v1195
        %1219 = vmatmul.f32.gmra.mxu0 %v1201
        %v1220 = vpop.f32.mrf.mxu0
        %v1221 = vadd.f32 %v1199, %v1220
        %1222 = vdwg.mxu0
        %v1223 = vadd.f32 %v956, %v1221
        %v1224 = vsel %vm535, %v1223, 0.0
        %1225 = vadd.xlane.f32.xlu0 %v1224
        %v1226 = vpop.xlane.xlu0 %1225
        %v1227 = vmul.f32 %v1226, %v806
        %v1228 = vsub.f32 %v1223, %v1227
        %v1229 = vmul.f32 %v1228, %v1228
        %v1230 = vsel %vm535, %v1229, 0.0
        %1231 = vadd.xlane.f32.xlu0 %v1230
        %v1232 = vpop.xlane.xlu0 %1231
        %v1233 = vmul.f32 %v1232, %v806
        %v1234 = vadd.f32 %v1233, 1e-05
        %v1235 = vrsqrt.pop %v1234
        %v1236 = vmul.f32 %v1235, %v1234
        %v1237 = vmul.f32 %v1236, %v1235
        %v1238 = vmul.f32 0.5, %v1237
        %v1239 = vsub.f32 1.5, %v1238
        %v1240 = vmul.f32 %v1235, %v1239
        %vm1241 = vweird.f32 %v1234
        %vm1242 = vweird.f32 %v1235
        %vm1243 = vmor %vm1241, %vm1242
        %v1244 = vsel %vm1243, %v1235, %v1240
        %v1245 = vmul.f32 %v1228, %v1244
        %v1246 = vperm.slane %v1193, 1
        %v1247 = vmul.f32 %v1245, %v1246
        %v1248 = vperm.slane %v1193, 2
        %v1249 = vadd.f32 %v1247, %v1248
        %s1250 = scalar_lea.vmem %s10, 32
        %v1251 = vld [vmem:[%s1250] sm:$0xff]
        %v1252 = vld [vmem:[%s1250 + $0x8] sm:$0xff]
        %v1253 = vld [vmem:[%s1250 + $0x10] sm:$0xff]
        %v1254 = vld [vmem:[%s1250 + $0x18] sm:$0xff]
        %v1255 = vperm.slane %v1193, 3
        %v1257 = vsel %vm535, %v1249, 0
        %1259 = vmatpush.msra.mxu0 0.0
        %1260 = vmatpush.msra.mxu0 0.0
        %1261 = vmatpush.msra.mxu0 0.0
        %1262 = vmatpush.msra.mxu0 0.0
        %1263 = vmatpush.msra.mxu0 0.0
        %1264 = vmatpush.msra.mxu0 0.0
        %1265 = vmatpush.msra.mxu0 0.0
        %1266 = vmatpush.msra.mxu0 0.0
        %1267 = vmatpush.msra.mxu0 0.0
        %1268 = vmatpush.msra.mxu0 0.0
        %1269 = vmatpush.msra.mxu0 0.0
        %1270 = vmatpush.msra.mxu0 0.0
        %1271 = vmatpush.msra.mxu0 %v1254
        %1272 = vmatpush.msra.mxu0 %v1253
        %1273 = vmatpush.msra.mxu0 %v1252
        %1274 = vmatpush.msra.mxu0 %v1251
        %1275 = vmatmul.f32.gmra.mxu0 %v1257
        %v1276 = vpop.f32.mrf.mxu0
        %v1277 = vadd.f32 %v1255, %v1276
        %1278 = vdwg.mxu0
        %v1279 = vmul.f32 %v1277, 0.5
        %v1280 = vmul.f32 %v1277, 0.70710677
        %v1281 = vmul.f32 %v1280, %v1280
        %v1282 = vmin.f32 16.0, %v1281
        %v1283 = vmul.f32 %v1282, 2.1237322e-06
        %v1284 = vadd.f32 %v1283, 0.00028619796
        %v1285 = vmul.f32 %v1282, %v1284
        %v1286 = vadd.f32 %v1285, 0.0036580483
        %v1287 = vmul.f32 %v1282, %v1286
        %v1288 = vadd.f32 %v1287, 0.05243302
        %v1289 = vmul.f32 %v1282, %v1288
        %v1290 = vadd.f32 %v1289, 0.18741608
        %v1291 = vmul.f32 %v1282, %v1290
        %v1292 = vadd.f32 %v1291, 1.1283791
        %v1293 = vmul.f32 %v1280, %v1292
        %v1294 = vmul.f32 %v1282, 3.8918573e-05
        %v1295 = vadd.f32 %v1294, 0.001143296
        %v1296 = vmul.f32 %v1282, %v1295
        %v1297 = vadd.f32 %v1296, 0.014752088
        %v1298 = vmul.f32 %v1282, %v1297
        %v1299 = vadd.f32 %v1298, 0.112945676
        %v1300 = vmul.f32 %v1282, %v1299
        %v1301 = vadd.f32 %v1300, 0.4994258
        %v1302 = vmul.f32 %v1282, %v1301
        %v1303 = vadd.f32 %v1302, 1.0
        %v1304 = vrcp.pop %v1303
        %v1305 = vmul.f32 %v1303, %v1304
        %v1306 = vsub.f32 1.0, %v1305
        %v1307 = vmul.f32 %v1304, %v1306
        %v1308 = vadd.f32 %v1304, %v1307
        %vm1309 = vweird.f32 %v1303
        %vm1310 = vweird.f32 %v1304
        %vm1311 = vmor %vm1309, %vm1310
        %v1312 = vsel %vm1311, %v1304, %v1308
        %v1313 = vand.u32 2147483647, %v1303
        %vm1314 = vcmp.eq.f32.partialorder %v1313, 8.507059e+37
        %v1315 = vand.u32 %v1303, 2147483648
        %v1316 = vor.u32 1.1754944e-38, %v1315
        %v1317 = vsel %vm1314, %v1316, %v1312
        %v1318 = vmul.f32 %v1293, %v1317
        %v1319 = vmin.f32 %v1318, 1.0
        %v1320 = vmax.f32 %v1319, -1.0
        %v1321 = vadd.f32 %v1320, 1.0
        %v1322 = vmul.f32 %v1279, %v1321
        %s1323 = scalar_lea.vmem %s11, 32
        %v1324 = vld [vmem:[%s1323] sm:$0xff]
        %v1325 = vld [vmem:[%s1323 + $0x8] sm:$0xff]
        %v1326 = vld [vmem:[%s1323 + $0x10] sm:$0xff]
        %v1327 = vld [vmem:[%s1323 + $0x18] sm:$0xff]
        %v1328 = vperm.slane %v1193, 4
        %v1330 = vsel %vm535, %v1322, 0
        %1332 = vmatpush.msra.mxu0 0.0
        %1333 = vmatpush.msra.mxu0 0.0
        %1334 = vmatpush.msra.mxu0 0.0
        %1335 = vmatpush.msra.mxu0 0.0
        %1336 = vmatpush.msra.mxu0 0.0
        %1337 = vmatpush.msra.mxu0 0.0
        %1338 = vmatpush.msra.mxu0 0.0
        %1339 = vmatpush.msra.mxu0 0.0
        %1340 = vmatpush.msra.mxu0 0.0
        %1341 = vmatpush.msra.mxu0 0.0
        %1342 = vmatpush.msra.mxu0 0.0
        %1343 = vmatpush.msra.mxu0 0.0
        %1344 = vmatpush.msra.mxu0 %v1327
        %1345 = vmatpush.msra.mxu0 %v1326
        %1346 = vmatpush.msra.mxu0 %v1325
        %1347 = vmatpush.msra.mxu0 %v1324
        %1348 = vmatmul.f32.gmra.mxu0 %v1330
        %v1349 = vpop.f32.mrf.mxu0
        %v1350 = vadd.f32 %v1328, %v1349
        %1351 = vdwg.mxu0
        %v1352 = vadd.f32 %v1249, %v1350
        %v1353 = vsel %vm535, %v1352, 0.0
        %1354 = vadd.xlane.f32.xlu0 %v1353
        %v1355 = vpop.xlane.xlu0 %1354
        %v1356 = vmul.f32 %v1355, %v806
        %v1357 = vsub.f32 %v1352, %v1356
        %v1358 = vmul.f32 %v1357, %v1357
        %v1359 = vsel %vm535, %v1358, 0.0
        %1360 = vadd.xlane.f32.xlu0 %v1359
        %v1361 = vpop.xlane.xlu0 %1360
        %v1362 = vmul.f32 %v1361, %v806
        %v1363 = vadd.f32 %v1362, 1e-05
        %v1364 = vrsqrt.pop %v1363
        %v1365 = vmul.f32 %v1364, %v1363
        %v1366 = vmul.f32 %v1365, %v1364
        %v1367 = vmul.f32 0.5, %v1366
        %v1368 = vsub.f32 1.5, %v1367
        %v1369 = vmul.f32 %v1364, %v1368
        %vm1370 = vweird.f32 %v1363
        %vm1371 = vweird.f32 %v1364
        %vm1372 = vmor %vm1370, %vm1371
        %v1373 = vsel %vm1372, %v1364, %v1369
        %v1374 = vmul.f32 %v1357, %v1373
        %v1375 = vperm.slane %v1193, 5
        %v1376 = vmul.f32 %v1374, %v1375
        %v1377 = vperm.slane %v1193, 6
        %v1378 = vadd.f32 %v1376, %v1377
        %v1379 = vld [vmem:[%s13] sm:$0x1]
        %v1380 = vld [vmem:[%s14] sm:$0x1]
        %v1381 = vsel %vm535, %v1378, 0.0
        %1382 = vadd.xlane.f32.xlu0 %v1381
        %v1383 = vpop.xlane.xlu0 %1382
        %v1384 = vmul.f32 %v1383, %v806
        %v1385 = vsub.f32 %v1378, %v1384
        %v1386 = vmul.f32 %v1385, %v1385
        %v1387 = vsel %vm535, %v1386, 0.0
        %1388 = vadd.xlane.f32.xlu0 %v1387
        %v1389 = vpop.xlane.xlu0 %1388
        %v1390 = vmul.f32 %v1389, %v806
        %v1391 = vadd.f32 %v1390, 1e-05
        %v1392 = vrsqrt.pop %v1391
        %v1393 = vmul.f32 %v1392, %v1391
        %v1394 = vmul.f32 %v1393, %v1392
        %v1395 = vmul.f32 0.5, %v1394
        %v1396 = vsub.f32 1.5, %v1395
        %v1397 = vmul.f32 %v1392, %v1396
        %vm1398 = vweird.f32 %v1391
        %vm1399 = vweird.f32 %v1392
        %vm1400 = vmor %vm1398, %vm1399
        %v1401 = vsel %vm1400, %v1392, %v1397
        %v1402 = vmul.f32 %v1385, %v1401
        %v1404 = vperm.slane %v1379, 0
        %v1406 = vmul.f32 %v1402, %v1404
        %v1408 = vperm.slane %v1380, 0
        %v1410 = vadd.f32 %v1406, %v1408
        %1411 = vst.msk [vmem:[%s498] sm:$0xff] %vm535, %v1410
        %s1412 = sand.u32 %s362, 1
        %s1413 = scalar_lea.sflag [#allocation3], %s1412
        %s1414 = sand.u32 %s362, 1
        %s1415 = smul.addr %s1414, 8
        %s1416 = scalar_lea.vmem [#allocation2], %s1415
        // Predicated region
        $region81: #{molformer_forward.1} parent=79 // pred_check
          %p1417 = pneg %p372
        $region82: #{molformer_forward.1} parent=79 // pred_check_branch
          %1419 = sbr.rel (%p1417) target = $region84
        $region83: #{molformer_forward.1} parent=79 // pred_region
          %1421 = vsyncadd %s1413, 0
          %s1422 = smul.addr %s29, 8
          %s1423 = scalar_lea.hbm %s15, %s1422
          %s1425 = sshll.u32 %s1416, 4
          %s1426 = int_to_ptr.vmem [resolvable:$true] %s1425
          %s1427 = sshll.u32 %s1423, 4
          %s1428 = int_to_ptr.hbm [resolvable:$true] %s1427
          %1430 = dma.vmem_to_hbm [thread:$0]  %s1426, 128, %s1428, %s1413
        $region84: #{molformer_forward.1} parent=79 // pred_fallthru
          _
      $region80: #{molformer_forward.1} parent=5 // pred_fallthru
        _
      %p1431 = scmp.le.s32.totalorder 2, %s24
      // Predicated region
      $region85: #{molformer_forward.1} parent=5 // pred_check
        %p1432 = pneg %p1431
      $region86: #{molformer_forward.1} parent=5 // pred_check_branch
        %1434 = sbr.rel (%p1432) target = $region88
      $region87: #{molformer_forward.1} parent=5 // pred_region
        %s1435 = ssub.s32 %s24, 2
        // Predicated region
        $region89: #{molformer_forward.1} parent=87 // pred_check
          %p1436 = pneg %p378
        $region90: #{molformer_forward.1} parent=87 // pred_check_branch
          %1438 = sbr.rel (%p1436) target = $region92
        $region91: #{molformer_forward.1} parent=87 // pred_region
          %s1439 = sand.u32 %s363, 1
          %s1440 = scalar_lea.sflag [#allocation3], %s1439
          %s1441 = sand.u32 %s363, 1
          %s1442 = smul.addr %s1441, 8
          %s1443 = scalar_lea.vmem [#allocation2], %s1442
          %1445 = dma.done %s1440, 128
        $region92: #{molformer_forward.1} parent=87 // pred_fallthru
          _
      $region88: #{molformer_forward.1} parent=5 // pred_fallthru
        _
    $region6: #{molformer_forward.1} parent=1 // loop_footer
      %s28 = sadd.s32 1, %s24
    $region7: #{molformer_forward.1} parent=1 // loop_footer_branch
      %23 = sbr.rel target = $region3
    $region8: #{molformer_forward.1} parent=1 // loop_exit
      _
    %1446 = vsyncpa [#allocation3], 1
    %s1447 = scalar_lea.sflag [#allocation3], 1
    %1448 = vsyncpa %s1447, 1

</llo_original>
